<compile_context>
chip_gen: v7x
topology: tpu7x:2x2x1
jax: 0.10.0
libtpu: 0.0.40
codegen_flags: <defaults>
</compile_context>

<pallas_src>
import functools

import jax
import jax.numpy as jnp
from jax.experimental import pallas as pl
from jax.experimental.pallas import tpu as pltpu

N_CLASSES = 20
POOL = 6
LANE = 128


def _round_up(x, m):
    return (x + m - 1) // m * m


def _vmem_limit_bytes():
    # Generation-aware scoped-VMEM cap: half of physical VMEM, never above
    # 32 MiB (v7x has 64 MiB/TC; v5e/v6e have 128 MiB).  Working sets here are
    # well under 2 MiB, so this only guards future tile sweeps.
    try:
        cap = int(pltpu.get_tpu_info().vmem_capacity_bytes)
        return min(cap // 2, 32 * 1024 * 1024)
    except Exception:
        return 32 * 1024 * 1024


# --------------------------------------------------------------------------
# Implicit-GEMM convolution kernel (no HBM im2col)
# --------------------------------------------------------------------------
def _conv_kernel(x_ref, w_ref, b_ref, o_ref, *, kh, kw, stride, toh, ow, relu):
    # x_ref: (S*S, Hph, Wph, Cin) bf16 stride-phase planes, fully VMEM resident
    # w_ref: (KH*KW, Cin, OCp)    bf16 per-tap weight matrices
    # b_ref: (1, OCp)             f32
    # o_ref: (TOH*OW, OCp)        bf16 output rows [pid*TOH, (pid+1)*TOH)
    cin = x_ref.shape[-1]
    ocp = o_ref.shape[-1]
    r0 = pl.multiple_of(pl.program_id(0) * toh, toh)

    acc = jnp.zeros((toh * ow, ocp), jnp.float32)
    for i in range(kh):
        for j in range(kw):
            phase = (i % stride) * stride + (j % stride)
            win = x_ref[phase,
                        pl.ds(r0 + i // stride, toh),
                        pl.ds(j // stride, ow), :]          # (TOH, OW, Cin), contiguous
            acc = acc + jnp.dot(win.reshape(toh * ow, cin),
                                w_ref[i * kw + j],
                                preferred_element_type=jnp.float32)
    y = acc + b_ref[...]
    if relu:
        y = jnp.maximum(y, 0.0)
    o_ref[...] = y.astype(o_ref.dtype)                      # bf16 writeback


def _pick_row_block(oh, ow):
    # Prefer >= 2 output-row blocks (keeps both v7x TensorCores busy) with a
    # sublane-aligned M block; fall back to the full extent.
    for nblk in (2, 1):
        if oh % nblk == 0 and ((oh // nblk) * ow) % 8 == 0:
            return oh // nblk
    return oh


def conv2d_pallas(x_hwc, conv, *, relu=True):
    # x_hwc: (H, W, Cin_pad) bf16; conv: prepped dict from prepare_params.
    h, w, cin = x_hwc.shape
    kh, kw, s, p = conv["kh"], conv["kw"], conv["stride"], conv["pad"]
    w_taps, bias = conv["w"], conv["b"]
    ocp = w_taps.shape[-1]
    oh = (h + 2 * p - kh) // s + 1
    ow = (w + 2 * p - kw) // s + 1

    # Spatial pad + stride-phase decomposition.  This is a *partition* of the
    # input (1x HBM traffic), unlike the KH*KW-fold duplication of im2col.
    hp2 = _round_up(h + 2 * p, s)
    wp2 = _round_up(w + 2 * p, s)
    xp = jnp.pad(x_hwc, ((p, hp2 - h - p), (p, wp2 - w - p), (0, 0)))
    hph, wph = hp2 // s, wp2 // s
    phases = xp.reshape(hph, s, wph, s, cin)
    phases = jnp.transpose(phases, (1, 3, 0, 2, 4)).reshape(s * s, hph, wph, cin)
    phases = phases.astype(jnp.bfloat16)

    toh = _pick_row_block(oh, ow)
    m_blk = toh * ow
    out = pl.pallas_call(
        functools.partial(_conv_kernel, kh=kh, kw=kw, stride=s,
                          toh=toh, ow=ow, relu=relu),
        out_shape=jax.ShapeDtypeStruct((oh * ow, ocp), jnp.bfloat16),
        grid_spec=pltpu.PrefetchScalarGridSpec(
            num_scalar_prefetch=0,
            grid=(oh // toh,),
            in_specs=[
                pl.BlockSpec((s * s, hph, wph, cin), lambda i: (0, 0, 0, 0)),
                pl.BlockSpec((kh * kw, cin, ocp), lambda i: (0, 0, 0)),
                pl.BlockSpec((1, ocp), lambda i: (0, 0)),
            ],
            out_specs=pl.BlockSpec((m_blk, ocp), lambda i: (i, 0)),
        ),
        compiler_params=pltpu.CompilerParams(
            dimension_semantics=("parallel",),
            vmem_limit_bytes=_vmem_limit_bytes(),
        ),
    )(phases, w_taps, bias)
    return out.reshape(oh, ow, ocp)


# --------------------------------------------------------------------------
# ROI max-pool: channels on lanes, ROI-blocked grid, coalesced stores
# --------------------------------------------------------------------------
def _roi_pool_kernel(hs_ref, he_ref, ws_ref, we_ref, feat_ref, out_ref,
                     *, pool, hf, wf, rb):
    # feat_ref: (Hf, Wf, Cp) bf16, channels on the 128-lane axis (full VMEM).
    # Bin boundaries live in SMEM.  out_ref: (RB, P, P, Cp) bf16 -- one
    # coalesced store per ROI instead of P*P single-sublane stores.
    feat = feat_ref[...].astype(jnp.float32)     # f32 masking math (v5e-safe VPU)
    w_idx = jax.lax.broadcasted_iota(jnp.int32, (1, wf, 1), 1)
    h_idx = jax.lax.broadcasted_iota(jnp.int32, (1, hf, 1), 1)
    r0 = pl.program_id(0) * rb

    @pl.loop(0, rb)
    def _(rr):
        r = r0 + rr
        # Pass 1: per-w-bin max over W -> list of (Hf, Cp), stacked to (P, Hf, Cp)
        wmaxes = []
        for pw in range(pool):
            wm = (w_idx >= ws_ref[r, pw]) & (w_idx < we_ref[r, pw])     # (1, Wf, 1)
            wmaxes.append(jnp.max(jnp.where(wm, feat, -jnp.inf), axis=1))
        wstack = jnp.stack(wmaxes, axis=0)                              # (P, Hf, Cp)
        # Pass 2: per-h-bin max over H for all P w-bins at once -> (P, P, Cp)
        slabs = []
        for ph in range(pool):
            hm = (h_idx >= hs_ref[r, ph]) & (h_idx < he_ref[r, ph])     # (1, Hf, 1)
            slabs.append(jnp.max(jnp.where(hm, wstack, -jnp.inf), axis=1))
        pooled = jnp.stack(slabs, axis=0)                               # (P, P, Cp)
        pooled = jnp.where(pooled == -jnp.inf, 0.0, pooled)             # empty bin -> 0
        out_ref[rr] = pooled.astype(out_ref.dtype)


def roi_pool_pallas(feat_hwc, rois, pool, spatial_scale, *, roi_block=8):
    # feat_hwc: (Hf, Wf, Cp); rois: (R, 4) = (x1, y1, x2, y2) in image coords.
    # Bin quantisation follows torchvision's RoIPool (index math in plain JAX).
    hf, wf, cp = feat_hwc.shape
    r = rois.shape[0]
    rb = min(roi_block, r)
    rp = _round_up(r, rb)

    rs_w = jnp.round(rois[:, 0] * spatial_scale)
    rs_h = jnp.round(rois[:, 1] * spatial_scale)
    re_w = jnp.round(rois[:, 2] * spatial_scale)
    re_h = jnp.round(rois[:, 3] * spatial_scale)
    roi_w = jnp.maximum(re_w - rs_w + 1.0, 1.0)
    roi_h = jnp.maximum(re_h - rs_h + 1.0, 1.0)
    bin_w = roi_w / pool
    bin_h = roi_h / pool
    p = jnp.arange(pool, dtype=jnp.float32)
    hstart = jnp.clip(jnp.floor(p[None, :] * bin_h[:, None]) + rs_h[:, None], 0, hf)
    hend = jnp.clip(jnp.ceil((p[None, :] + 1.0) * bin_h[:, None]) + rs_h[:, None], 0, hf)
    wstart = jnp.clip(jnp.floor(p[None, :] * bin_w[:, None]) + rs_w[:, None], 0, wf)
    wend = jnp.clip(jnp.ceil((p[None, :] + 1.0) * bin_w[:, None]) + rs_w[:, None], 0, wf)

    def to_table(a):  # int32 SMEM tables, padded to a whole number of ROI blocks
        return jnp.pad(a.astype(jnp.int32), ((0, rp - r), (0, 0)))

    hs, he, ws, we = (to_table(a) for a in (hstart, hend, wstart, wend))

    smem = pl.BlockSpec(memory_space=pltpu.MemorySpace.SMEM)
    kernel = functools.partial(_roi_pool_kernel, pool=pool, hf=hf, wf=wf, rb=rb)
    return pl.pallas_call(
        kernel,
        grid=(rp // rb,),
        in_specs=[smem, smem, smem, smem,
                  pl.BlockSpec((hf, wf, cp), lambda i: (0, 0, 0))],
        out_specs=pl.BlockSpec((rb, pool, pool, cp), lambda i: (i, 0, 0, 0)),
        out_shape=jax.ShapeDtypeStruct((rp, pool, pool, cp), feat_hwc.dtype),
        # ROI blocks are independent -> lets v7x shard across its 2 TCs.
        compiler_params=pltpu.CompilerParams(dimension_semantics=("parallel",)),
    )(hs, he, ws, we, feat_hwc)


# --------------------------------------------------------------------------
# Fused classifier + detection head (fc1/relu/fc2/relu/heads/dual softmax)
# --------------------------------------------------------------------------
def _head_kernel(x_ref, w1_ref, b1_ref, w2_ref, b2_ref, wsb_ref, bsb_ref,
                 o_ref, *, nc, nc_pad):
    h = jnp.dot(x_ref[...], w1_ref[...], preferred_element_type=jnp.float32)
    h = jnp.maximum(h + b1_ref[...], 0.0)
    # nn.Dropout(p=0.5) is identity in eval mode.
    h = jnp.dot(h.astype(w2_ref.dtype), w2_ref[...],
                preferred_element_type=jnp.float32)
    h = jnp.maximum(h + b2_ref[...], 0.0)
    # score_fc and bbox_fc fused into one dot; each head occupies its own
    # lane-aligned 128-column slab so both slices below are free.
    sb = jnp.dot(h.astype(wsb_ref.dtype), wsb_ref[...],
                 preferred_element_type=jnp.float32) + bsb_ref[...]
    scores = sb[:, :nc_pad]
    bboxes = sb[:, nc_pad:2 * nc_pad]
    valid = jax.lax.broadcasted_iota(jnp.int32, scores.shape, 1) < nc

    # F.softmax(scores, dim=1): over classes, per ROI (padded columns masked out)
    s = jnp.where(valid, scores, -jnp.inf)
    es = jnp.exp(s - jnp.max(s, axis=1, keepdims=True))
    scores_sm = es * pl.reciprocal(jnp.sum(es, axis=1, keepdims=True), approx=True)
    # F.softmax(bboxes, dim=0): over ROIs, per class (all R rows are resident)
    eb = jnp.exp(bboxes - jnp.max(bboxes, axis=0, keepdims=True))
    bboxes_sm = eb * pl.reciprocal(jnp.sum(eb, axis=0, keepdims=True), approx=True)

    o_ref[...] = jnp.where(valid, scores_sm * bboxes_sm, 0.0)   # lane-dense (R, 128)


def wsddn_head_pallas(x, prep):
    # x: (R, P*P*Cp) pooled features (bf16).  Returns a lane-dense (R, nc_pad)
    # f32 block; the caller slices the first n_classes columns.
    r = x.shape[0]
    nc, nc_pad = prep["nc"], prep["nc_pad"]
    w1, b1 = prep["fc1_w"], prep["fc1_b"]
    w2, b2 = prep["fc2_w"], prep["fc2_b"]
    wsb, bsb = prep["head_w"], prep["head_b"]

    # Single-block design: softmax(dim=0) needs every ROI row resident.  Guard
    # the VMEM budget explicitly instead of silently blowing up at scale.
    approx_bytes = 2 * (x.size + w1.size + w2.size + wsb.size) \
        + 4 * r * (2 * w1.shape[1] + 2 * nc_pad)
    assert approx_bytes < 24 * 1024 * 1024, (
        "fused WSDDN head exceeds its single-block VMEM budget; "
        "TODO(synk): dispatch to a gridded matmul + two-pass axis-0 softmax")

    vmem = pl.BlockSpec(memory_space=pltpu.MemorySpace.VMEM)
    return pl.pallas_call(
        functools.partial(_head_kernel, nc=nc, nc_pad=nc_pad),
        out_shape=jax.ShapeDtypeStruct((r, nc_pad), jnp.float32),
        in_specs=[vmem] * 7,
        out_specs=vmem,
        compiler_params=pltpu.CompilerParams(vmem_limit_bytes=_vmem_limit_bytes()),
    )(x.astype(jnp.bfloat16), w1, b1, w2, b2, wsb, bsb)


# --------------------------------------------------------------------------
# One-time parameter preparation (hoisted out of the forward path)
# --------------------------------------------------------------------------
def prepare_params(params, *, pool=POOL):
    def prep_conv(w, b, cin_pad, *, stride, pad):
        oc, ci, kh, kw = w.shape
        oc_pad = _round_up(oc, LANE)
        wt = jnp.transpose(w, (2, 3, 1, 0))                      # (KH, KW, Cin, OC)
        wt = jnp.pad(wt, ((0, 0), (0, 0), (0, cin_pad - ci), (0, oc_pad - oc)))
        wt = wt.reshape(kh * kw, cin_pad, oc_pad).astype(jnp.bfloat16)
        bb = jnp.pad(b.astype(jnp.float32), (0, oc_pad - oc)).reshape(1, oc_pad)
        return dict(w=wt, b=bb, kh=kh, kw=kw, stride=stride, pad=pad,
                    oc=oc, oc_pad=oc_pad)

    cin1 = params["conv1_w"].shape[1]
    cin1_pad = _round_up(cin1, LANE)
    conv1 = prep_conv(params["conv1_w"], params["conv1_b"], cin1_pad, stride=2, pad=1)
    conv2 = prep_conv(params["conv2_w"], params["conv2_b"], conv1["oc_pad"],
                      stride=1, pad=1)

    hid = params["fc1_w"].shape[1]
    hid_pad = _round_up(hid, LANE)
    c_real, c_pad = conv2["oc"], conv2["oc_pad"]

    # Original fc1 row index (torch flatten of (R, C, P, P)) is c*P*P + ph*P + pw.
    # The pooled layout here is (R, P, P, Cpad) -> row (ph*P + pw)*Cpad + c, so
    # the weight rows are permuted (and zero padded) once here instead of
    # transposing the pooled activations every forward.  Math is identical
    # (up to the bf16 cast used for the MXU).
    w1 = params["fc1_w"].reshape(c_real, pool, pool, hid)
    w1 = jnp.transpose(w1, (1, 2, 0, 3))
    w1 = jnp.pad(w1, ((0, 0), (0, 0), (0, c_pad - c_real), (0, hid_pad - hid)))
    w1 = w1.reshape(pool * pool * c_pad, hid_pad).astype(jnp.bfloat16)
    b1 = jnp.pad(params["fc1_b"].astype(jnp.float32), (0, hid_pad - hid)).reshape(1, hid_pad)

    w2 = jnp.pad(params["fc2_w"],
                 ((0, hid_pad - hid), (0, hid_pad - hid))).astype(jnp.bfloat16)
    b2 = jnp.pad(params["fc2_b"].astype(jnp.float32), (0, hid_pad - hid)).reshape(1, hid_pad)

    nc = params["score_w"].shape[1]
    nc_pad = _round_up(nc, LANE)
    score_blk = jnp.pad(params["score_w"], ((0, hid_pad - hid), (0, nc_pad - nc)))
    bbox_blk = jnp.pad(params["bbox_w"], ((0, hid_pad - hid), (0, nc_pad - nc)))
    head_w = jnp.concatenate([score_blk, bbox_blk], axis=1).astype(jnp.bfloat16)
    head_b = jnp.concatenate(
        [jnp.pad(params["score_b"].astype(jnp.float32), (0, nc_pad - nc)),
         jnp.pad(params["bbox_b"].astype(jnp.float32), (0, nc_pad - nc))]
    ).reshape(1, 2 * nc_pad)

    return dict(conv1=conv1, conv2=conv2, cin_pad=cin1_pad,
                fc1_w=w1, fc1_b=b1, fc2_w=w2, fc2_b=b2,
                head_w=head_w, head_b=head_b, nc=nc, nc_pad=nc_pad, pool=pool)


# --------------------------------------------------------------------------
# Forward pass
# --------------------------------------------------------------------------
def wsddn_forward(prep, image, rois):
    # "features": small deterministic stand-in for the pretrained AlexNet
    # backbone (features[-1] replaced by Identity() => the stack ends with ReLU).
    # TODO(synk): pretrained torchvision AlexNet weights cannot be loaded here;
    # a synthetic 2-layer conv stack stands in for self.features.
    x = jnp.transpose(image, (0, 2, 3, 1))[0]                    # NCHW -> (H, W, C)
    x = jnp.pad(x, ((0, 0), (0, 0), (0, prep["cin_pad"] - x.shape[-1])))
    x = x.astype(jnp.bfloat16)
    x = conv2d_pallas(x, prep["conv1"], relu=True)               # (H1, W1, Cp) bf16
    feat = conv2d_pallas(x, prep["conv2"], relu=True)            # (Hf, Wf, Cp) bf16

    spatial_scale = feat.shape[0] / image.shape[-2]              # analog of 31/512
    pool = prep["pool"]
    r = rois.shape[1]
    pooled = roi_pool_pallas(feat, rois[0], pool, spatial_scale)  # (Rp, P, P, Cp)
    pooled_flat = pooled[:r].reshape(r, -1)                      # row = (ph*P+pw)*Cp + c

    cls_prob = wsddn_head_pallas(pooled_flat, prep)              # (R, nc_pad) lane dense
    # TODO(synk): training-only BCE loss path (build_loss / self.cross_entropy)
    # is not implemented; forward returns cls_prob exactly as the module does.
    return cls_prob[:, :prep["nc"]]


# --------------------------------------------------------------------------
if __name__ == "__main__":
    key = jax.random.PRNGKey(0)
    ks = jax.random.split(key, 12)

    # small shapes consistent with the module's structure
    N, CIN, H, W = 1, 3, 32, 32
    C1, C2 = 8, 16             # feature channels (stand-in for AlexNet's 256)
    R = 8                      # number of ROIs
    HID = 64                   # classifier hidden width (stand-in for 4096)

    image = jax.random.normal(ks[0], (N, CIN, H, W), jnp.float32)
    xy1 = jax.random.uniform(ks[1], (1, R, 2), minval=0.0, maxval=14.0)
    wh = jax.random.uniform(ks[2], (1, R, 2), minval=6.0, maxval=16.0)
    rois = jnp.concatenate([xy1, xy1 + wh], axis=-1)   # (1, R, 4): x1, y1, x2, y2

    params = dict(
        conv1_w=0.1 * jax.random.normal(ks[3], (C1, CIN, 3, 3), jnp.float32),
        conv1_b=0.1 * jax.random.normal(ks[4], (C1,), jnp.float32),
        conv2_w=0.1 * jax.random.normal(ks[5], (C2, C1, 3, 3), jnp.float32),
        conv2_b=0.1 * jax.random.normal(ks[6], (C2,), jnp.float32),
        # Linear weights stored as [in, out] (transpose of nn.Linear's [out, in]).
        fc1_w=0.05 * jax.random.normal(ks[7], (C2 * POOL * POOL, HID), jnp.float32),
        fc1_b=jnp.zeros((HID,), jnp.float32),
        fc2_w=0.05 * jax.random.normal(ks[8], (HID, HID), jnp.float32),
        fc2_b=jnp.zeros((HID,), jnp.float32),
        score_w=0.05 * jax.random.normal(ks[9], (HID, N_CLASSES), jnp.float32),
        score_b=jnp.zeros((N_CLASSES,), jnp.float32),
        bbox_w=0.05 * jax.random.normal(ks[10], (HID, N_CLASSES), jnp.float32),
        bbox_b=jnp.zeros((N_CLASSES,), jnp.float32),
    )

    prep = prepare_params(params)          # one-time weight prep (not per forward)
    cls_prob = wsddn_forward(prep, image, rois)
    cls_prob = jax.block_until_ready(cls_prob)
    assert cls_prob.shape == (R, N_CLASSES)
    assert bool(jnp.all(jnp.isfinite(cls_prob)))
    print("KERNEL_OK")
</pallas_src>

<mosaic_0001>
module attributes {stable_mosaic.version = 11 : i64} {
  func.func @_conv_kernel(%arg0: i32, %arg1: memref<4x17x17x128xbf16, #tpu.memory_space<vmem>>, %arg2: memref<9x128x128xbf16, #tpu.memory_space<vmem>>, %arg3: memref<1x128xf32, #tpu.memory_space<vmem>>, %arg4: memref<128x128xbf16, #tpu.memory_space<vmem>>) attributes {dimension_semantics = [#tpu.dimension_semantics<parallel>], iteration_bounds = array<i64: 2>, scalar_prefetch = 0 : i64, scratch_operands = 0 : i64, tpu.core_type = #tpu.core_type<tc>, window_params = [{pipeline_mode = #tpu.pipeline_mode<synchronous>, transform_indices = @transform_0, window_bounds = array<i64: 4, 17, 17, 128>}, {pipeline_mode = #tpu.pipeline_mode<synchronous>, transform_indices = @transform_1, window_bounds = array<i64: 9, 128, 128>}, {pipeline_mode = #tpu.pipeline_mode<synchronous>, transform_indices = @transform_2, window_bounds = array<i64: 1, 128>}, {transform_indices = @transform_3, window_bounds = array<i64: 128, 128>}]} {
    %c8_i32 = arith.constant 8 : i32
    %0 = arith.muli %arg0, %c8_i32 : i32
    %1 = tpu.assume_multiple %0, 8 : i32
    %cst = arith.constant 0.000000e+00 : f32
    %2 = vector.broadcast %cst : f32 to vector<128x128xf32>
    %c0_i32 = arith.constant 0 : i32
    %3 = arith.addi %1, %c0_i32 : i32
    %c0 = arith.constant 0 : index
    %4 = arith.index_cast %3 : i32 to index
    %c0_0 = arith.constant 0 : index
    %c0_1 = arith.constant 0 : index
    %5 = vector.load %arg1[%c0, %4, %c0_0, %c0_1] : memref<4x17x17x128xbf16, #tpu.memory_space<vmem>>, vector<1x8x16x128xbf16>
    %6 = vector.shape_cast %5 : vector<1x8x16x128xbf16> to vector<8x16x128xbf16>
    %7 = vector.shape_cast %6 : vector<8x16x128xbf16> to vector<128x128xbf16>
    %c0_2 = arith.constant 0 : index
    %c0_3 = arith.constant 0 : index
    %c0_4 = arith.constant 0 : index
    %8 = vector.load %arg2[%c0_2, %c0_3, %c0_4] : memref<9x128x128xbf16, #tpu.memory_space<vmem>>, vector<1x128x128xbf16>
    %9 = vector.shape_cast %8 : vector<1x128x128xbf16> to vector<128x128xbf16>
    %cst_5 = arith.constant dense<0.000000e+00> : vector<128x128xf32>
    %10 = tpu.matmul %7, %9, %cst_5 {dimension_numbers = #tpu.dot_dimension_numbers<[1], [0], [0], [1], [0, 0, 1, 1], [], []>} : vector<128x128xbf16>, vector<128x128xbf16>, vector<128x128xf32> -> vector<128x128xf32>
    %11 = arith.addf %2, %10 : vector<128x128xf32>
    %c0_i32_6 = arith.constant 0 : i32
    %12 = arith.addi %1, %c0_i32_6 : i32
    %c1 = arith.constant 1 : index
    %13 = arith.index_cast %12 : i32 to index
    %c0_7 = arith.constant 0 : index
    %c0_8 = arith.constant 0 : index
    %14 = vector.load %arg1[%c1, %13, %c0_7, %c0_8] : memref<4x17x17x128xbf16, #tpu.memory_space<vmem>>, vector<1x8x16x128xbf16>
    %15 = vector.shape_cast %14 : vector<1x8x16x128xbf16> to vector<8x16x128xbf16>
    %16 = vector.shape_cast %15 : vector<8x16x128xbf16> to vector<128x128xbf16>
    %c1_9 = arith.constant 1 : index
    %c0_10 = arith.constant 0 : index
    %c0_11 = arith.constant 0 : index
    %17 = vector.load %arg2[%c1_9, %c0_10, %c0_11] : memref<9x128x128xbf16, #tpu.memory_space<vmem>>, vector<1x128x128xbf16>
    %18 = vector.shape_cast %17 : vector<1x128x128xbf16> to vector<128x128xbf16>
    %cst_12 = arith.constant dense<0.000000e+00> : vector<128x128xf32>
    %19 = tpu.matmul %16, %18, %cst_12 {dimension_numbers = #tpu.dot_dimension_numbers<[1], [0], [0], [1], [0, 0, 1, 1], [], []>} : vector<128x128xbf16>, vector<128x128xbf16>, vector<128x128xf32> -> vector<128x128xf32>
    %20 = arith.addf %11, %19 : vector<128x128xf32>
    %c0_i32_13 = arith.constant 0 : i32
    %21 = arith.addi %1, %c0_i32_13 : i32
    %c0_14 = arith.constant 0 : index
    %22 = arith.index_cast %21 : i32 to index
    %c1_15 = arith.constant 1 : index
    %c0_16 = arith.constant 0 : index
    %23 = vector.load %arg1[%c0_14, %22, %c1_15, %c0_16] : memref<4x17x17x128xbf16, #tpu.memory_space<vmem>>, vector<1x8x16x128xbf16>
    %24 = vector.shape_cast %23 : vector<1x8x16x128xbf16> to vector<8x16x128xbf16>
    %25 = vector.shape_cast %24 : vector<8x16x128xbf16> to vector<128x128xbf16>
    %c2 = arith.constant 2 : index
    %c0_17 = arith.constant 0 : index
    %c0_18 = arith.constant 0 : index
    %26 = vector.load %arg2[%c2, %c0_17, %c0_18] : memref<9x128x128xbf16, #tpu.memory_space<vmem>>, vector<1x128x128xbf16>
    %27 = vector.shape_cast %26 : vector<1x128x128xbf16> to vector<128x128xbf16>
    %cst_19 = arith.constant dense<0.000000e+00> : vector<128x128xf32>
    %28 = tpu.matmul %25, %27, %cst_19 {dimension_numbers = #tpu.dot_dimension_numbers<[1], [0], [0], [1], [0, 0, 1, 1], [], []>} : vector<128x128xbf16>, vector<128x128xbf16>, vector<128x128xf32> -> vector<128x128xf32>
    %29 = arith.addf %20, %28 : vector<128x128xf32>
    %c0_i32_20 = arith.constant 0 : i32
    %30 = arith.addi %1, %c0_i32_20 : i32
    %c2_21 = arith.constant 2 : index
    %31 = arith.index_cast %30 : i32 to index
    %c0_22 = arith.constant 0 : index
    %c0_23 = arith.constant 0 : index
    %32 = vector.load %arg1[%c2_21, %31, %c0_22, %c0_23] : memref<4x17x17x128xbf16, #tpu.memory_space<vmem>>, vector<1x8x16x128xbf16>
    %33 = vector.shape_cast %32 : vector<1x8x16x128xbf16> to vector<8x16x128xbf16>
    %34 = vector.shape_cast %33 : vector<8x16x128xbf16> to vector<128x128xbf16>
    %c3 = arith.constant 3 : index
    %c0_24 = arith.constant 0 : index
    %c0_25 = arith.constant 0 : index
    %35 = vector.load %arg2[%c3, %c0_24, %c0_25] : memref<9x128x128xbf16, #tpu.memory_space<vmem>>, vector<1x128x128xbf16>
    %36 = vector.shape_cast %35 : vector<1x128x128xbf16> to vector<128x128xbf16>
    %cst_26 = arith.constant dense<0.000000e+00> : vector<128x128xf32>
    %37 = tpu.matmul %34, %36, %cst_26 {dimension_numbers = #tpu.dot_dimension_numbers<[1], [0], [0], [1], [0, 0, 1, 1], [], []>} : vector<128x128xbf16>, vector<128x128xbf16>, vector<128x128xf32> -> vector<128x128xf32>
    %38 = arith.addf %29, %37 : vector<128x128xf32>
    %c0_i32_27 = arith.constant 0 : i32
    %39 = arith.addi %1, %c0_i32_27 : i32
    %c3_28 = arith.constant 3 : index
    %40 = arith.index_cast %39 : i32 to index
    %c0_29 = arith.constant 0 : index
    %c0_30 = arith.constant 0 : index
    %41 = vector.load %arg1[%c3_28, %40, %c0_29, %c0_30] : memref<4x17x17x128xbf16, #tpu.memory_space<vmem>>, vector<1x8x16x128xbf16>
    %42 = vector.shape_cast %41 : vector<1x8x16x128xbf16> to vector<8x16x128xbf16>
    %43 = vector.shape_cast %42 : vector<8x16x128xbf16> to vector<128x128xbf16>
    %c4 = arith.constant 4 : index
    %c0_31 = arith.constant 0 : index
    %c0_32 = arith.constant 0 : index
    %44 = vector.load %arg2[%c4, %c0_31, %c0_32] : memref<9x128x128xbf16, #tpu.memory_space<vmem>>, vector<1x128x128xbf16>
    %45 = vector.shape_cast %44 : vector<1x128x128xbf16> to vector<128x128xbf16>
    %cst_33 = arith.constant dense<0.000000e+00> : vector<128x128xf32>
    %46 = tpu.matmul %43, %45, %cst_33 {dimension_numbers = #tpu.dot_dimension_numbers<[1], [0], [0], [1], [0, 0, 1, 1], [], []>} : vector<128x128xbf16>, vector<128x128xbf16>, vector<128x128xf32> -> vector<128x128xf32>
    %47 = arith.addf %38, %46 : vector<128x128xf32>
    %c0_i32_34 = arith.constant 0 : i32
    %48 = arith.addi %1, %c0_i32_34 : i32
    %c2_35 = arith.constant 2 : index
    %49 = arith.index_cast %48 : i32 to index
    %c1_36 = arith.constant 1 : index
    %c0_37 = arith.constant 0 : index
    %50 = vector.load %arg1[%c2_35, %49, %c1_36, %c0_37] : memref<4x17x17x128xbf16, #tpu.memory_space<vmem>>, vector<1x8x16x128xbf16>
    %51 = vector.shape_cast %50 : vector<1x8x16x128xbf16> to vector<8x16x128xbf16>
    %52 = vector.shape_cast %51 : vector<8x16x128xbf16> to vector<128x128xbf16>
    %c5 = arith.constant 5 : index
    %c0_38 = arith.constant 0 : index
    %c0_39 = arith.constant 0 : index
    %53 = vector.load %arg2[%c5, %c0_38, %c0_39] : memref<9x128x128xbf16, #tpu.memory_space<vmem>>, vector<1x128x128xbf16>
    %54 = vector.shape_cast %53 : vector<1x128x128xbf16> to vector<128x128xbf16>
    %cst_40 = arith.constant dense<0.000000e+00> : vector<128x128xf32>
    %55 = tpu.matmul %52, %54, %cst_40 {dimension_numbers = #tpu.dot_dimension_numbers<[1], [0], [0], [1], [0, 0, 1, 1], [], []>} : vector<128x128xbf16>, vector<128x128xbf16>, vector<128x128xf32> -> vector<128x128xf32>
    %56 = arith.addf %47, %55 : vector<128x128xf32>
    %c1_i32 = arith.constant 1 : i32
    %57 = arith.addi %1, %c1_i32 : i32
    %c0_41 = arith.constant 0 : index
    %58 = arith.index_cast %57 : i32 to index
    %c0_42 = arith.constant 0 : index
    %c0_43 = arith.constant 0 : index
    %59 = vector.load %arg1[%c0_41, %58, %c0_42, %c0_43] : memref<4x17x17x128xbf16, #tpu.memory_space<vmem>>, vector<1x8x16x128xbf16>
    %60 = vector.shape_cast %59 : vector<1x8x16x128xbf16> to vector<8x16x128xbf16>
    %61 = vector.shape_cast %60 : vector<8x16x128xbf16> to vector<128x128xbf16>
    %c6 = arith.constant 6 : index
    %c0_44 = arith.constant 0 : index
    %c0_45 = arith.constant 0 : index
    %62 = vector.load %arg2[%c6, %c0_44, %c0_45] : memref<9x128x128xbf16, #tpu.memory_space<vmem>>, vector<1x128x128xbf16>
    %63 = vector.shape_cast %62 : vector<1x128x128xbf16> to vector<128x128xbf16>
    %cst_46 = arith.constant dense<0.000000e+00> : vector<128x128xf32>
    %64 = tpu.matmul %61, %63, %cst_46 {dimension_numbers = #tpu.dot_dimension_numbers<[1], [0], [0], [1], [0, 0, 1, 1], [], []>} : vector<128x128xbf16>, vector<128x128xbf16>, vector<128x128xf32> -> vector<128x128xf32>
    %65 = arith.addf %56, %64 : vector<128x128xf32>
    %c1_i32_47 = arith.constant 1 : i32
    %66 = arith.addi %1, %c1_i32_47 : i32
    %c1_48 = arith.constant 1 : index
    %67 = arith.index_cast %66 : i32 to index
    %c0_49 = arith.constant 0 : index
    %c0_50 = arith.constant 0 : index
    %68 = vector.load %arg1[%c1_48, %67, %c0_49, %c0_50] : memref<4x17x17x128xbf16, #tpu.memory_space<vmem>>, vector<1x8x16x128xbf16>
    %69 = vector.shape_cast %68 : vector<1x8x16x128xbf16> to vector<8x16x128xbf16>
    %70 = vector.shape_cast %69 : vector<8x16x128xbf16> to vector<128x128xbf16>
    %c7 = arith.constant 7 : index
    %c0_51 = arith.constant 0 : index
    %c0_52 = arith.constant 0 : index
    %71 = vector.load %arg2[%c7, %c0_51, %c0_52] : memref<9x128x128xbf16, #tpu.memory_space<vmem>>, vector<1x128x128xbf16>
    %72 = vector.shape_cast %71 : vector<1x128x128xbf16> to vector<128x128xbf16>
    %cst_53 = arith.constant dense<0.000000e+00> : vector<128x128xf32>
    %73 = tpu.matmul %70, %72, %cst_53 {dimension_numbers = #tpu.dot_dimension_numbers<[1], [0], [0], [1], [0, 0, 1, 1], [], []>} : vector<128x128xbf16>, vector<128x128xbf16>, vector<128x128xf32> -> vector<128x128xf32>
    %74 = arith.addf %65, %73 : vector<128x128xf32>
    %c1_i32_54 = arith.constant 1 : i32
    %75 = arith.addi %1, %c1_i32_54 : i32
    %c0_55 = arith.constant 0 : index
    %76 = arith.index_cast %75 : i32 to index
    %c1_56 = arith.constant 1 : index
    %c0_57 = arith.constant 0 : index
    %77 = vector.load %arg1[%c0_55, %76, %c1_56, %c0_57] : memref<4x17x17x128xbf16, #tpu.memory_space<vmem>>, vector<1x8x16x128xbf16>
    %78 = vector.shape_cast %77 : vector<1x8x16x128xbf16> to vector<8x16x128xbf16>
    %79 = vector.shape_cast %78 : vector<8x16x128xbf16> to vector<128x128xbf16>
    %c8 = arith.constant 8 : index
    %c0_58 = arith.constant 0 : index
    %c0_59 = arith.constant 0 : index
    %80 = vector.load %arg2[%c8, %c0_58, %c0_59] : memref<9x128x128xbf16, #tpu.memory_space<vmem>>, vector<1x128x128xbf16>
    %81 = vector.shape_cast %80 : vector<1x128x128xbf16> to vector<128x128xbf16>
    %cst_60 = arith.constant dense<0.000000e+00> : vector<128x128xf32>
    %82 = tpu.matmul %79, %81, %cst_60 {dimension_numbers = #tpu.dot_dimension_numbers<[1], [0], [0], [1], [0, 0, 1, 1], [], []>} : vector<128x128xbf16>, vector<128x128xbf16>, vector<128x128xf32> -> vector<128x128xf32>
    %83 = arith.addf %74, %82 : vector<128x128xf32>
    %c0_61 = arith.constant 0 : index
    %c0_62 = arith.constant 0 : index
    %84 = vector.load %arg3[%c0_61, %c0_62] : memref<1x128xf32, #tpu.memory_space<vmem>>, vector<1x128xf32>
    %85 = vector.broadcast %84 : vector<1x128xf32> to vector<128x128xf32>
    %86 = arith.addf %83, %85 : vector<128x128xf32>
    %cst_63 = arith.constant 0.000000e+00 : f32
    %87 = vector.broadcast %cst_63 : f32 to vector<128x128xf32>
    %88 = arith.maximumf %86, %87 : vector<128x128xf32>
    %89 = arith.truncf %88 : vector<128x128xf32> to vector<128x128xbf16>
    %c0_64 = arith.constant 0 : index
    %c0_65 = arith.constant 0 : index
    %90 = vector.load %arg4[%c0_64, %c0_65] : memref<128x128xbf16, #tpu.memory_space<vmem>>, vector<128x128xbf16>
    tpu.vector_store %arg4[%c0_64, %c0_65], %89 {strides = array<i32>} : memref<128x128xbf16, #tpu.memory_space<vmem>>, vector<128x128xbf16>,
    return
  }
  func.func @transform_0(%arg0: i32) -> (i32, i32, i32, i32) {
    %c0_i32 = arith.constant 0 : i32
    %c0_i32_0 = arith.constant 0 : i32
    %c0_i32_1 = arith.constant 0 : i32
    %c0_i32_2 = arith.constant 0 : i32
    %c0_i32_3 = arith.constant 0 : i32
    return %c0_i32, %c0_i32_0, %c0_i32_1, %c0_i32_2 : i32, i32, i32, i32
  }
  func.func @transform_1(%arg0: i32) -> (i32, i32, i32) {
    %c0_i32 = arith.constant 0 : i32
    %c0_i32_0 = arith.constant 0 : i32
    %c0_i32_1 = arith.constant 0 : i32
    %c0_i32_2 = arith.constant 0 : i32
    return %c0_i32, %c0_i32_0, %c0_i32_1 : i32, i32, i32
  }
  func.func @transform_2(%arg0: i32) -> (i32, i32) {
    %c0_i32 = arith.constant 0 : i32
    %c0_i32_0 = arith.constant 0 : i32
    %c0_i32_1 = arith.constant 0 : i32
    return %c0_i32, %c0_i32_0 : i32, i32
  }
  func.func @transform_3(%arg0: i32) -> (i32, i32) {
    %c0_i32 = arith.constant 0 : i32
    %c0_i32_0 = arith.constant 0 : i32
    return %arg0, %c0_i32 : i32, i32
  }
}

</mosaic_0001>

<llo_original>
// kernel: tpu_custom_call.1
$region0: #{tpu_custom_call.1}
  #allocation0 [shape = 'u32[]', space=smem, size = 0x4, offset = 0x4, fixed_abs, tag = 'smem constant byte address 0x4 - core index']
  #allocation1 [shape = 'u32[144,128]{1,0:T(1,128)}', space=vmem, size = 0x12000, scoped, tag = 'internal scratch']
  %s0 = inlined_call_operand.vmem [shape: bf16[4,17,17,128], index: 0, kind: input, shape index: {}]
  %s1 = inlined_call_operand.vmem [shape: bf16[9,128,128], index: 1, kind: input, shape index: {}]
  %s2 = inlined_call_operand.vmem [shape: f32[1,128], index: 2, kind: input, shape index: {}]
  %s3 = inlined_call_operand.hbm [shape: bf16[256,128], index: 3, kind: output, shape index: {}]
  %s4 = sld [smem:[#allocation0]]
  $region45: #{tpu_custom_call.1} parent=0
    _
  %s6 = ssub.s32 1, %s4
  %s7 = scalar_select 0, %s6, %s4
  $region1: #{tpu_custom_call.1} parent=0
    #allocation2 [shape = 'u8[65536]{0}', space=vmem, size = 0x10000, scoped, tag = 'output window, operand 0']
    #allocation3 [shape = 's32[2]{0}', space=sflag, size = 0x8, scoped, tag = 'scoped memory for tpu_custom_call.1']
    %8 = vsyncpa [#allocation3], 0
    %s9 = scalar_lea.sflag [#allocation3], 1
    %10 = vsyncpa %s9, 0
    loop: start=0, step=1, limit=4
    $region2: #{tpu_custom_call.1} parent=1 // loop_pre_header
      _
    $region3: #{tpu_custom_call.1} parent=1 // loop_header
      %s12 = sphi 0, %s16
      %p13 = scmp.ge.s32.totalorder %s12, 4
      %s20 = sphi 0, %s20
      %s22 = sphi 0, %s20
      %s23 = sphi 0, %s22
      %s37 = sphi 0, %s23
      %s41 = sphi 0, %s41
      %s43 = sphi 0, %s41
      %s44 = sphi 0, %s43
      %s58 = sphi 0, %s44
      %s62 = sphi 0, %s62
      %s64 = sphi 0, %s62
      %s65 = sphi 0, %s64
      %s79 = sphi 0, %s65
      %s85 = sphi 0, %s87
      %s88 = sphi 0, %s85
      %s89 = sphi 0, %s88
      %s105 = sphi 0, %s89
    $region4: #{tpu_custom_call.1} parent=1 // loop_header_branch
      %15 = sbr.rel (%p13) target = $region8
    $region5: #{tpu_custom_call.1} parent=1 // loop_body
      %s17 = ssub.s32 %s12, 1
      %s18 = ssub.s32 %s12, 2
      %s19 = sadd.s32 %s12, 1
      %s21 = sadd.s32 %s20, 1
      %p24 = scmp.eq.s32.totalorder %s12, 1
      %p25 = scmp.ne.s32.totalorder %s20, %s22
      %p26 = scmp.eq.s32.totalorder %s12, 0
      %p27 = por %p25, %p26
      %p28 = scmp.ne.s32.totalorder %s20, %s22
      %p29 = scmp.eq.s32.totalorder %s17, 1
      %p30 = por %p28, %p29
      %p31 = scmp.ne.s32.totalorder %s22, %s23
      %p32 = scmp.eq.s32.totalorder %s17, 0
      %p33 = por %p31, %p32
      %p34 = scmp.ne.s32.totalorder %s22, %s23
      %p35 = scmp.eq.s32.totalorder %s18, 1
      %p36 = por %p34, %p35
      %p38 = scmp.ne.s32.totalorder %s23, %s37
      %p39 = scmp.eq.s32.totalorder %s18, 0
      %p40 = por %p38, %p39
      %s42 = sadd.s32 %s41, 1
      %p45 = scmp.eq.s32.totalorder %s12, 1
      %p46 = scmp.ne.s32.totalorder %s41, %s43
      %p47 = scmp.eq.s32.totalorder %s12, 0
      %p48 = por %p46, %p47
      %p49 = scmp.ne.s32.totalorder %s41, %s43
      %p50 = scmp.eq.s32.totalorder %s17, 1
      %p51 = por %p49, %p50
      %p52 = scmp.ne.s32.totalorder %s43, %s44
      %p53 = scmp.eq.s32.totalorder %s17, 0
      %p54 = por %p52, %p53
      %p55 = scmp.ne.s32.totalorder %s43, %s44
      %p56 = scmp.eq.s32.totalorder %s18, 1
      %p57 = por %p55, %p56
      %p59 = scmp.ne.s32.totalorder %s44, %s58
      %p60 = scmp.eq.s32.totalorder %s18, 0
      %p61 = por %p59, %p60
      %s63 = sadd.s32 %s62, 1
      %p66 = scmp.eq.s32.totalorder %s12, 1
      %p67 = scmp.ne.s32.totalorder %s62, %s64
      %p68 = scmp.eq.s32.totalorder %s12, 0
      %p69 = por %p67, %p68
      %p70 = scmp.ne.s32.totalorder %s62, %s64
      %p71 = scmp.eq.s32.totalorder %s17, 1
      %p72 = por %p70, %p71
      %p73 = scmp.ne.s32.totalorder %s64, %s65
      %p74 = scmp.eq.s32.totalorder %s17, 0
      %p75 = por %p73, %p74
      %p76 = scmp.ne.s32.totalorder %s64, %s65
      %p77 = scmp.eq.s32.totalorder %s18, 1
      %p78 = por %p76, %p77
      %p80 = scmp.ne.s32.totalorder %s65, %s79
      %p81 = scmp.eq.s32.totalorder %s18, 0
      %p82 = por %p80, %p81
      %s83 = ssub.s32 %s12, %s19
      %p84 = scmp.eq.s32.totalorder %s83, 0
      %s86 = sadd.s32 %s85, 1
      %s87 = scalar_select %p84, %s85, %s86
      %p90 = pneg %p84
      %p91 = scmp.eq.s32.totalorder %s12, 1
      %p92 = por %p90, %p91
      %p93 = scmp.ne.s32.totalorder %s85, %s88
      %p94 = scmp.eq.s32.totalorder %s12, 0
      %p95 = por %p93, %p94
      %p96 = scmp.ne.s32.totalorder %s85, %s88
      %p97 = scmp.eq.s32.totalorder %s17, 1
      %p98 = por %p96, %p97
      %p99 = scmp.ne.s32.totalorder %s88, %s89
      %p100 = scmp.eq.s32.totalorder %s17, 0
      %p101 = por %p99, %p100
      %p102 = scmp.ne.s32.totalorder %s88, %s89
      %p103 = scmp.eq.s32.totalorder %s18, 1
      %p104 = por %p102, %p103
      %p106 = scmp.ne.s32.totalorder %s89, %s105
      %p107 = scmp.eq.s32.totalorder %s18, 0
      %p108 = por %p106, %p107
      %p109 = scmp.le.s32.totalorder 1, %s12
      %p110 = scmp.lt.s32.totalorder %s12, 3
      %p111 = pnand %p109, %p110
      %p112 = pneg %p111
      // Predicated region
      $region9: #{tpu_custom_call.1} parent=5 // pred_check
        _
      $region10: #{tpu_custom_call.1} parent=5 // pred_check_branch
        %114 = sbr.rel (%p111) target = $region12
      $region11: #{tpu_custom_call.1} parent=5 // pred_region
        %s115 = ssub.s32 %s12, 1
        // Predicated region
        $region13: #{tpu_custom_call.1} parent=11 // pred_check
          %p116 = pneg %p33
        $region14: #{tpu_custom_call.1} parent=11 // pred_check_branch
          %118 = sbr.rel (%p116) target = $region16
        $region15: #{tpu_custom_call.1} parent=11 // pred_region
          _
        $region16: #{tpu_custom_call.1} parent=11 // pred_fallthru
          _
        // Predicated region
        $region17: #{tpu_custom_call.1} parent=11 // pred_check
          %p119 = pneg %p54
        $region18: #{tpu_custom_call.1} parent=11 // pred_check_branch
          %121 = sbr.rel (%p119) target = $region20
        $region19: #{tpu_custom_call.1} parent=11 // pred_region
          _
        $region20: #{tpu_custom_call.1} parent=11 // pred_fallthru
          _
        // Predicated region
        $region21: #{tpu_custom_call.1} parent=11 // pred_check
          %p122 = pneg %p75
        $region22: #{tpu_custom_call.1} parent=11 // pred_check_branch
          %124 = sbr.rel (%p122) target = $region24
        $region23: #{tpu_custom_call.1} parent=11 // pred_region
          _
        $region24: #{tpu_custom_call.1} parent=11 // pred_fallthru
          _
      $region12: #{tpu_custom_call.1} parent=5 // pred_fallthru
        _
      %p125 = scmp.lt.s32.totalorder %s12, 2
      // Predicated region
      $region25: #{tpu_custom_call.1} parent=5 // pred_check
        %p126 = pneg %p125
      $region26: #{tpu_custom_call.1} parent=5 // pred_check_branch
        %128 = sbr.rel (%p126) target = $region28
      $region27: #{tpu_custom_call.1} parent=5 // pred_region
        _
      $region28: #{tpu_custom_call.1} parent=5 // pred_fallthru
        _
      %p129 = scmp.le.s32.totalorder 1, %s12
      %p130 = scmp.lt.s32.totalorder %s12, 3
      %p131 = pnand %p129, %p130
      %p132 = pneg %p131
      // Predicated region
      $region29: #{tpu_custom_call.1} parent=5 // pred_check
        _
      $region30: #{tpu_custom_call.1} parent=5 // pred_check_branch
        %134 = sbr.rel (%p131) target = $region32
      $region31: #{tpu_custom_call.1} parent=5 // pred_region
        %s135 = ssub.s32 %s12, 1
        %p136 = pneg %p33
        %p137 = pneg %p30
        %p138 = pneg %p54
        %p139 = pneg %p51
        %p140 = pneg %p75
        %p141 = pneg %p72
        %p142 = pneg %p101
        %p143 = pneg %p98
        %s144 = sand.u32 %s88, 1
        %s145 = scalar_lea.sflag [#allocation3], %s144
        %s146 = sand.u32 %s88, 1
        %s147 = smul.addr %s146, 64
        %s148 = scalar_lea.vmem [#allocation2], %s147
        %s149 = smul.u32 16, %s17
        %s151 = smul.u32 %s17, 8
        %s152 = smul.u32 %s151, 3
        %s153 = smul.addr %s152, 4
        %s154 = scalar_lea.vmem %s0, %s153
        %v155 = vld [vmem:[%s154] sm:$0xf]
        %v156 = vld [vmem:[%s154 + $0x4] sm:$0xf]
        %v157 = vld [vmem:[%s154 + $0xc] sm:$0xf]
        %v158 = vld [vmem:[%s154 + $0x10] sm:$0xf]
        %v159 = vld [vmem:[%s154 + $0x18] sm:$0xf]
        %v160 = vld [vmem:[%s154 + $0x1c] sm:$0xf]
        %v161 = vld [vmem:[%s154 + $0x24] sm:$0xf]
        %v162 = vld [vmem:[%s154 + $0x28] sm:$0xf]
        %v163 = vld [vmem:[%s154 + $0x30] sm:$0xf]
        %v164 = vld [vmem:[%s154 + $0x34] sm:$0xf]
        %v165 = vld [vmem:[%s154 + $0x3c] sm:$0xf]
        %v166 = vld [vmem:[%s154 + $0x40] sm:$0xf]
        %v167 = vld [vmem:[%s154 + $0x48] sm:$0xf]
        %v168 = vld [vmem:[%s154 + $0x4c] sm:$0xf]
        %v169 = vld [vmem:[%s154 + $0x54] sm:$0xf]
        %v170 = vld [vmem:[%s154 + $0x58] sm:$0xf]
        %v171 = vld [vmem:[%s1] sm:$0xf]
        %v172 = vld [vmem:[%s1 + $0x4] sm:$0xf]
        %v173 = vld [vmem:[%s1 + $0x8] sm:$0xf]
        %v174 = vld [vmem:[%s1 + $0xc] sm:$0xf]
        %v175 = vld [vmem:[%s1 + $0x10] sm:$0xf]
        %v176 = vld [vmem:[%s1 + $0x14] sm:$0xf]
        %v177 = vld [vmem:[%s1 + $0x18] sm:$0xf]
        %v178 = vld [vmem:[%s1 + $0x1c] sm:$0xf]
        %v179 = vld [vmem:[%s1 + $0x20] sm:$0xf]
        %v180 = vld [vmem:[%s1 + $0x24] sm:$0xf]
        %v181 = vld [vmem:[%s1 + $0x28] sm:$0xf]
        %v182 = vld [vmem:[%s1 + $0x2c] sm:$0xf]
        %v183 = vld [vmem:[%s1 + $0x30] sm:$0xf]
        %v184 = vld [vmem:[%s1 + $0x34] sm:$0xf]
        %v185 = vld [vmem:[%s1 + $0x38] sm:$0xf]
        %v186 = vld [vmem:[%s1 + $0x3c] sm:$0xf]
        %s187 = sadd.s32 %s152, 51
        %s188 = smul.addr %s187, 4
        %s189 = scalar_lea.vmem %s0, %s188
        %v190 = vld [vmem:[%s189] sm:$0xf]
        %v191 = vld [vmem:[%s189 + $0x4] sm:$0xf]
        %v192 = vld [vmem:[%s189 + $0xc] sm:$0xf]
        %v193 = vld [vmem:[%s189 + $0x10] sm:$0xf]
        %v194 = vld [vmem:[%s189 + $0x18] sm:$0xf]
        %v195 = vld [vmem:[%s189 + $0x1c] sm:$0xf]
        %v196 = vld [vmem:[%s189 + $0x24] sm:$0xf]
        %v197 = vld [vmem:[%s189 + $0x28] sm:$0xf]
        %v198 = vld [vmem:[%s189 + $0x30] sm:$0xf]
        %v199 = vld [vmem:[%s189 + $0x34] sm:$0xf]
        %v200 = vld [vmem:[%s189 + $0x3c] sm:$0xf]
        %v201 = vld [vmem:[%s189 + $0x40] sm:$0xf]
        %v202 = vld [vmem:[%s189 + $0x48] sm:$0xf]
        %v203 = vld [vmem:[%s189 + $0x4c] sm:$0xf]
        %v204 = vld [vmem:[%s189 + $0x54] sm:$0xf]
        %v205 = vld [vmem:[%s189 + $0x58] sm:$0xf]
        %s206 = scalar_lea.vmem %s1, 64
        %v207 = vld [vmem:[%s206] sm:$0xf]
        %v208 = vld [vmem:[%s206 + $0x4] sm:$0xf]
        %v209 = vld [vmem:[%s206 + $0x8] sm:$0xf]
        %v210 = vld [vmem:[%s206 + $0xc] sm:$0xf]
        %v211 = vld [vmem:[%s206 + $0x10] sm:$0xf]
        %v212 = vld [vmem:[%s206 + $0x14] sm:$0xf]
        %v213 = vld [vmem:[%s206 + $0x18] sm:$0xf]
        %v214 = vld [vmem:[%s206 + $0x1c] sm:$0xf]
        %v215 = vld [vmem:[%s206 + $0x20] sm:$0xf]
        %v216 = vld [vmem:[%s206 + $0x24] sm:$0xf]
        %v217 = vld [vmem:[%s206 + $0x28] sm:$0xf]
        %v218 = vld [vmem:[%s206 + $0x2c] sm:$0xf]
        %v219 = vld [vmem:[%s206 + $0x30] sm:$0xf]
        %v220 = vld [vmem:[%s206 + $0x34] sm:$0xf]
        %v221 = vld [vmem:[%s206 + $0x38] sm:$0xf]
        %v222 = vld [vmem:[%s206 + $0x3c] sm:$0xf]
        %v239 = vunpack.c.l.b16 %v190
        %v240 = vunpack.c.l.b16 %v191
        %v241 = vunpack.c.l.b16 %v192
        %v242 = vunpack.c.l.b16 %v193
        %v243 = vunpack.c.l.b16 %v194
        %v244 = vunpack.c.l.b16 %v195
        %v245 = vunpack.c.l.b16 %v196
        %v246 = vunpack.c.l.b16 %v197
        %v247 = vunpack.c.l.b16 %v198
        %v248 = vunpack.c.l.b16 %v199
        %v249 = vunpack.c.l.b16 %v200
        %v250 = vunpack.c.l.b16 %v201
        %v251 = vunpack.c.l.b16 %v202
        %v252 = vunpack.c.l.b16 %v203
        %v253 = vunpack.c.l.b16 %v204
        %v254 = vunpack.c.l.b16 %v205
        %v255 = vpack.c.b16 %v240, %v239
        %v256 = vpack.c.b16 %v242, %v241
        %v257 = vpack.c.b16 %v244, %v243
        %v258 = vpack.c.b16 %v246, %v245
        %v259 = vpack.c.b16 %v248, %v247
        %v260 = vpack.c.b16 %v250, %v249
        %v261 = vpack.c.b16 %v252, %v251
        %v262 = vpack.c.b16 %v254, %v253
        %v287 = vunpack.c.l.b16 %v207
        %v288 = vunpack.c.l.b16 %v208
        %v289 = vunpack.c.l.b16 %v209
        %v290 = vunpack.c.l.b16 %v210
        %v291 = vunpack.c.l.b16 %v211
        %v292 = vunpack.c.l.b16 %v212
        %v293 = vunpack.c.l.b16 %v213
        %v294 = vunpack.c.l.b16 %v214
        %v295 = vunpack.c.l.b16 %v215
        %v296 = vunpack.c.l.b16 %v216
        %v297 = vunpack.c.l.b16 %v217
        %v298 = vunpack.c.l.b16 %v218
        %v299 = vunpack.c.l.b16 %v219
        %v300 = vunpack.c.l.b16 %v220
        %v301 = vunpack.c.l.b16 %v221
        %v302 = vunpack.c.l.b16 %v222
        %v303 = vpack.c.b16 %v288, %v287
        %v304 = vpack.c.b16 %v290, %v289
        %v305 = vpack.c.b16 %v292, %v291
        %v306 = vpack.c.b16 %v294, %v293
        %v307 = vpack.c.b16 %v296, %v295
        %v308 = vpack.c.b16 %v298, %v297
        %v309 = vpack.c.b16 %v300, %v299
        %v310 = vpack.c.b16 %v302, %v301
        %319 = vmatprep.subr.bf16.mxu0 0
        %320 = vmatpush1.bf16.msra.mxu0 %v303
        %321 = vmatprep.subr.bf16.mxu0 0
        %322 = vmatpush1.bf16.msra.mxu0 %v304
        %323 = vmatprep.subr.bf16.mxu0 0
        %324 = vmatpush1.bf16.msra.mxu0 %v305
        %325 = vmatprep.subr.bf16.mxu0 0
        %326 = vmatpush1.bf16.msra.mxu0 %v306
        %327 = vmatprep.subr.bf16.mxu0 0
        %328 = vmatpush1.bf16.msra.mxu0 %v307
        %329 = vmatprep.subr.bf16.mxu0 0
        %330 = vmatpush1.bf16.msra.mxu0 %v308
        %331 = vmatprep.subr.bf16.mxu0 0
        %332 = vmatpush1.bf16.msra.mxu0 %v309
        %333 = vmatprep.subr.bf16.mxu0 0
        %334 = vmatpush1.bf16.msra.mxu0 %v310
        %335 = vmatprep.subr.bf16.mxu0 0
        %336 = vmatpush1.bf16.msra.mxu0 0
        %337 = vmatprep.subr.bf16.mxu0 0
        %338 = vmatpush1.bf16.msra.mxu0 0
        %339 = vmatprep.subr.bf16.mxu0 0
        %340 = vmatpush1.bf16.msra.mxu0 0
        %341 = vmatprep.subr.bf16.mxu0 0
        %342 = vmatpush1.bf16.msra.mxu0 0
        %343 = vmatprep.subr.bf16.mxu0 0
        %344 = vmatpush1.bf16.msra.mxu0 0
        %345 = vmatprep.subr.bf16.mxu0 0
        %346 = vmatpush1.bf16.msra.mxu0 0
        %347 = vmatprep.subr.bf16.mxu0 0
        %348 = vmatpush1.bf16.msra.mxu0 0
        %349 = vmatprep.subr.bf16.mxu0 0
        %350 = vmatpush1.bf16.msra.mxu0 0
        %351 = vmatprep.mubr.bf16.mxu0 0
        %352 = vmatmul.mubr.bf16.gmra.mrb[0].mxu0 %v255
        %v353 = vpop.f32.mrb[0].mxu0
        %v354 = vadd.f32 0.0, %v353
        %v355 = vpop.f32.mrb[0].mxu0
        %v356 = vpop.f32.mrb[0].mxu0
        %v357 = vadd.f32 0.0, %v356
        %v358 = vpop.f32.mrb[0].mxu0
        %359 = vmatprep.mubr.bf16.mxu0 0
        %360 = vmatmul.mubr.bf16.gmra.mrb[0].mxu0 %v256
        %v361 = vpop.f32.mrb[0].mxu0
        %v362 = vadd.f32 0.0, %v361
        %v363 = vpop.f32.mrb[0].mxu0
        %v364 = vpop.f32.mrb[0].mxu0
        %v365 = vadd.f32 0.0, %v364
        %v366 = vpop.f32.mrb[0].mxu0
        %367 = vmatprep.mubr.bf16.mxu0 0
        %368 = vmatmul.mubr.bf16.gmra.mrb[0].mxu0 %v257
        %v369 = vpop.f32.mrb[0].mxu0
        %v370 = vadd.f32 0.0, %v369
        %v371 = vpop.f32.mrb[0].mxu0
        %v372 = vpop.f32.mrb[0].mxu0
        %v373 = vadd.f32 0.0, %v372
        %v374 = vpop.f32.mrb[0].mxu0
        %375 = vmatprep.mubr.bf16.mxu0 0
        %376 = vmatmul.mubr.bf16.gmra.mrb[0].mxu0 %v258
        %v377 = vpop.f32.mrb[0].mxu0
        %v378 = vadd.f32 0.0, %v377
        %v379 = vpop.f32.mrb[0].mxu0
        %v380 = vpop.f32.mrb[0].mxu0
        %v381 = vadd.f32 0.0, %v380
        %v382 = vpop.f32.mrb[0].mxu0
        %383 = vmatprep.mubr.bf16.mxu0 0
        %384 = vmatmul.mubr.bf16.gmra.mrb[0].mxu0 %v259
        %v385 = vpop.f32.mrb[0].mxu0
        %v386 = vadd.f32 0.0, %v385
        %v387 = vpop.f32.mrb[0].mxu0
        %v388 = vpop.f32.mrb[0].mxu0
        %v389 = vadd.f32 0.0, %v388
        %v390 = vpop.f32.mrb[0].mxu0
        %391 = vmatprep.mubr.bf16.mxu0 0
        %392 = vmatmul.mubr.bf16.gmra.mrb[0].mxu0 %v260
        %v393 = vpop.f32.mrb[0].mxu0
        %v394 = vadd.f32 0.0, %v393
        %v395 = vpop.f32.mrb[0].mxu0
        %v396 = vpop.f32.mrb[0].mxu0
        %v397 = vadd.f32 0.0, %v396
        %v398 = vpop.f32.mrb[0].mxu0
        %399 = vmatprep.mubr.bf16.mxu0 0
        %400 = vmatmul.mubr.bf16.gmra.mrb[0].mxu0 %v261
        %v401 = vpop.f32.mrb[0].mxu0
        %v402 = vadd.f32 0.0, %v401
        %v403 = vpop.f32.mrb[0].mxu0
        %v404 = vpop.f32.mrb[0].mxu0
        %v405 = vadd.f32 0.0, %v404
        %v406 = vpop.f32.mrb[0].mxu0
        %407 = vmatprep.mubr.bf16.mxu0 0
        %408 = vmatmul.mubr.bf16.gmra.mrb[0].mxu0 %v262
        %v409 = vpop.f32.mrb[0].mxu0
        %v410 = vadd.f32 0.0, %v409
        %v411 = vpop.f32.mrb[0].mxu0
        %v412 = vpop.f32.mrb[0].mxu0
        %v413 = vadd.f32 0.0, %v412
        %v414 = vpop.f32.mrb[0].mxu0
        %415 = vdwg.mxu0
        %v432 = vunpack.c.l.b16 %v155
        %v433 = vunpack.c.l.b16 %v156
        %v434 = vunpack.c.l.b16 %v157
        %v435 = vunpack.c.l.b16 %v158
        %v436 = vunpack.c.l.b16 %v159
        %v437 = vunpack.c.l.b16 %v160
        %v438 = vunpack.c.l.b16 %v161
        %v439 = vunpack.c.l.b16 %v162
        %v440 = vunpack.c.l.b16 %v163
        %v441 = vunpack.c.l.b16 %v164
        %v442 = vunpack.c.l.b16 %v165
        %v443 = vunpack.c.l.b16 %v166
        %v444 = vunpack.c.l.b16 %v167
        %v445 = vunpack.c.l.b16 %v168
        %v446 = vunpack.c.l.b16 %v169
        %v447 = vunpack.c.l.b16 %v170
        %v448 = vpack.c.b16 %v433, %v432
        %v449 = vpack.c.b16 %v435, %v434
        %v450 = vpack.c.b16 %v437, %v436
        %v451 = vpack.c.b16 %v439, %v438
        %v452 = vpack.c.b16 %v441, %v440
        %v453 = vpack.c.b16 %v443, %v442
        %v454 = vpack.c.b16 %v445, %v444
        %v455 = vpack.c.b16 %v447, %v446
        %v480 = vunpack.c.l.b16 %v171
        %v481 = vunpack.c.l.b16 %v172
        %v482 = vunpack.c.l.b16 %v173
        %v483 = vunpack.c.l.b16 %v174
        %v484 = vunpack.c.l.b16 %v175
        %v485 = vunpack.c.l.b16 %v176
        %v486 = vunpack.c.l.b16 %v177
        %v487 = vunpack.c.l.b16 %v178
        %v488 = vunpack.c.l.b16 %v179
        %v489 = vunpack.c.l.b16 %v180
        %v490 = vunpack.c.l.b16 %v181
        %v491 = vunpack.c.l.b16 %v182
        %v492 = vunpack.c.l.b16 %v183
        %v493 = vunpack.c.l.b16 %v184
        %v494 = vunpack.c.l.b16 %v185
        %v495 = vunpack.c.l.b16 %v186
        %v496 = vpack.c.b16 %v481, %v480
        %v497 = vpack.c.b16 %v483, %v482
        %v498 = vpack.c.b16 %v485, %v484
        %v499 = vpack.c.b16 %v487, %v486
        %v500 = vpack.c.b16 %v489, %v488
        %v501 = vpack.c.b16 %v491, %v490
        %v502 = vpack.c.b16 %v493, %v492
        %v503 = vpack.c.b16 %v495, %v494
        %512 = vmatprep.subr.bf16.mxu0 0
        %513 = vmatpush1.bf16.msra.mxu0 %v496
        %514 = vmatprep.subr.bf16.mxu0 0
        %515 = vmatpush1.bf16.msra.mxu0 %v497
        %516 = vmatprep.subr.bf16.mxu0 0
        %517 = vmatpush1.bf16.msra.mxu0 %v498
        %518 = vmatprep.subr.bf16.mxu0 0
        %519 = vmatpush1.bf16.msra.mxu0 %v499
        %520 = vmatprep.subr.bf16.mxu0 0
        %521 = vmatpush1.bf16.msra.mxu0 %v500
        %522 = vmatprep.subr.bf16.mxu0 0
        %523 = vmatpush1.bf16.msra.mxu0 %v501
        %524 = vmatprep.subr.bf16.mxu0 0
        %525 = vmatpush1.bf16.msra.mxu0 %v502
        %526 = vmatprep.subr.bf16.mxu0 0
        %527 = vmatpush1.bf16.msra.mxu0 %v503
        %528 = vmatprep.subr.bf16.mxu0 0
        %529 = vmatpush1.bf16.msra.mxu0 0
        %530 = vmatprep.subr.bf16.mxu0 0
        %531 = vmatpush1.bf16.msra.mxu0 0
        %532 = vmatprep.subr.bf16.mxu0 0
        %533 = vmatpush1.bf16.msra.mxu0 0
        %534 = vmatprep.subr.bf16.mxu0 0
        %535 = vmatpush1.bf16.msra.mxu0 0
        %536 = vmatprep.subr.bf16.mxu0 0
        %537 = vmatpush1.bf16.msra.mxu0 0
        %538 = vmatprep.subr.bf16.mxu0 0
        %539 = vmatpush1.bf16.msra.mxu0 0
        %540 = vmatprep.subr.bf16.mxu0 0
        %541 = vmatpush1.bf16.msra.mxu0 0
        %542 = vmatprep.subr.bf16.mxu0 0
        %543 = vmatpush1.bf16.msra.mxu0 0
        %544 = vmatprep.mubr.bf16.mxu0 0
        %545 = vmatmul.mubr.bf16.gmra.mrb[0].mxu0 %v448
        %v546 = vpop.f32.mrb[0].mxu0
        %v547 = vadd.f32 %v354, %v546
        %v548 = vpop.f32.mrb[0].mxu0
        %v549 = vpop.f32.mrb[0].mxu0
        %v550 = vadd.f32 %v357, %v549
        %v551 = vpop.f32.mrb[0].mxu0
        %552 = vmatprep.mubr.bf16.mxu0 0
        %553 = vmatmul.mubr.bf16.gmra.mrb[0].mxu0 %v449
        %v554 = vpop.f32.mrb[0].mxu0
        %v555 = vadd.f32 %v362, %v554
        %v556 = vpop.f32.mrb[0].mxu0
        %v557 = vpop.f32.mrb[0].mxu0
        %v558 = vadd.f32 %v365, %v557
        %v559 = vpop.f32.mrb[0].mxu0
        %560 = vmatprep.mubr.bf16.mxu0 0
        %561 = vmatmul.mubr.bf16.gmra.mrb[0].mxu0 %v450
        %v562 = vpop.f32.mrb[0].mxu0
        %v563 = vadd.f32 %v370, %v562
        %v564 = vpop.f32.mrb[0].mxu0
        %v565 = vpop.f32.mrb[0].mxu0
        %v566 = vadd.f32 %v373, %v565
        %v567 = vpop.f32.mrb[0].mxu0
        %568 = vmatprep.mubr.bf16.mxu0 0
        %569 = vmatmul.mubr.bf16.gmra.mrb[0].mxu0 %v451
        %v570 = vpop.f32.mrb[0].mxu0
        %v571 = vadd.f32 %v378, %v570
        %v572 = vpop.f32.mrb[0].mxu0
        %v573 = vpop.f32.mrb[0].mxu0
        %v574 = vadd.f32 %v381, %v573
        %v575 = vpop.f32.mrb[0].mxu0
        %576 = vmatprep.mubr.bf16.mxu0 0
        %577 = vmatmul.mubr.bf16.gmra.mrb[0].mxu0 %v452
        %v578 = vpop.f32.mrb[0].mxu0
        %v579 = vadd.f32 %v386, %v578
        %v580 = vpop.f32.mrb[0].mxu0
        %v581 = vpop.f32.mrb[0].mxu0
        %v582 = vadd.f32 %v389, %v581
        %v583 = vpop.f32.mrb[0].mxu0
        %584 = vmatprep.mubr.bf16.mxu0 0
        %585 = vmatmul.mubr.bf16.gmra.mrb[0].mxu0 %v453
        %v586 = vpop.f32.mrb[0].mxu0
        %v587 = vadd.f32 %v394, %v586
        %v588 = vpop.f32.mrb[0].mxu0
        %v589 = vpop.f32.mrb[0].mxu0
        %v590 = vadd.f32 %v397, %v589
        %v591 = vpop.f32.mrb[0].mxu0
        %592 = vmatprep.mubr.bf16.mxu0 0
        %593 = vmatmul.mubr.bf16.gmra.mrb[0].mxu0 %v454
        %v594 = vpop.f32.mrb[0].mxu0
        %v595 = vadd.f32 %v402, %v594
        %v596 = vpop.f32.mrb[0].mxu0
        %v597 = vpop.f32.mrb[0].mxu0
        %v598 = vadd.f32 %v405, %v597
        %v599 = vpop.f32.mrb[0].mxu0
        %600 = vmatprep.mubr.bf16.mxu0 0
        %601 = vmatmul.mubr.bf16.gmra.mrb[0].mxu0 %v455
        %v602 = vpop.f32.mrb[0].mxu0
        %v603 = vadd.f32 %v410, %v602
        %v604 = vpop.f32.mrb[0].mxu0
        %v605 = vpop.f32.mrb[0].mxu0
        %v606 = vadd.f32 %v413, %v605
        %v607 = vpop.f32.mrb[0].mxu0
        %608 = vdwg.mxu0
        %v609 = vld [vmem:[%s154] sm:$0xf]
        %v610 = vld [vmem:[%s154 + $0x4] sm:$0xf]
        %v611 = vld [vmem:[%s154 + $0x8] sm:$0x1]
        %v612 = vld [vmem:[%s154 + $0xc] sm:$0xf]
        %v613 = vld [vmem:[%s154 + $0x10] sm:$0xf]
        %v614 = vld [vmem:[%s154 + $0x14] sm:$0x1]
        %v615 = vld [vmem:[%s154 + $0x18] sm:$0xf]
        %v616 = vld [vmem:[%s154 + $0x1c] sm:$0xf]
        %v617 = vld [vmem:[%s154 + $0x20] sm:$0x1]
        %v618 = vld [vmem:[%s154 + $0x24] sm:$0xf]
        %v619 = vld [vmem:[%s154 + $0x28] sm:$0xf]
        %v620 = vld [vmem:[%s154 + $0x2c] sm:$0x1]
        %v621 = vld [vmem:[%s154 + $0x30] sm:$0xf]
        %v622 = vld [vmem:[%s154 + $0x34] sm:$0xf]
        %v623 = vld [vmem:[%s154 + $0x38] sm:$0x1]
        %v624 = vld [vmem:[%s154 + $0x3c] sm:$0xf]
        %v625 = vld [vmem:[%s154 + $0x40] sm:$0xf]
        %v626 = vld [vmem:[%s154 + $0x44] sm:$0x1]
        %v627 = vld [vmem:[%s154 + $0x48] sm:$0xf]
        %v628 = vld [vmem:[%s154 + $0x4c] sm:$0xf]
        %v629 = vld [vmem:[%s154 + $0x50] sm:$0x1]
        %v630 = vld [vmem:[%s154 + $0x54] sm:$0xf]
        %v631 = vld [vmem:[%s154 + $0x58] sm:$0xf]
        %v632 = vld [vmem:[%s154 + $0x5c] sm:$0x1]
        %vm633 = vsmask.f32 3328
        %vm634 = vsmask.f32 7440
        %vm635 = vmor %vm633, %vm634
        %v637 = vshrl.u32 %v609, 16
        %v639 = vrot.slane %v637, 4
        %v640 = vshll.u32 %v609, 16
        %v642 = vrot.slane %v640, 5
        %v643 = vor.u32 %v639, %v642
        %v644 = vrot.slane %v643, 4
        %v646 = vshll.u32 %v610, 16
        %v648 = vrot.slane %v646, 5
        %v649 = vsel %vm635, %v644, %v648
        %v650 = vshrl.u32 %v610, 16
        %v652 = vrot.slane %v650, 4
        %v653 = vor.u32 %v652, %v648
        %v654 = vrot.slane %v653, 4
        %v656 = vshll.u32 %v611, 16
        %v658 = vrot.slane %v656, 5
        %v659 = vsel %vm635, %v654, %v658
        %v661 = vshrl.u32 %v612, 16
        %v663 = vrot.slane %v661, 4
        %v664 = vshll.u32 %v612, 16
        %v666 = vrot.slane %v664, 5
        %v667 = vor.u32 %v663, %v666
        %v668 = vrot.slane %v667, 4
        %v670 = vshll.u32 %v613, 16
        %v672 = vrot.slane %v670, 5
        %v673 = vsel %vm635, %v668, %v672
        %v674 = vshrl.u32 %v613, 16
        %v676 = vrot.slane %v674, 4
        %v677 = vor.u32 %v676, %v672
        %v678 = vrot.slane %v677, 4
        %v680 = vshll.u32 %v614, 16
        %v682 = vrot.slane %v680, 5
        %v683 = vsel %vm635, %v678, %v682
        %v685 = vshrl.u32 %v615, 16
        %v687 = vrot.slane %v685, 4
        %v688 = vshll.u32 %v615, 16
        %v690 = vrot.slane %v688, 5
        %v691 = vor.u32 %v687, %v690
        %v692 = vrot.slane %v691, 4
        %v694 = vshll.u32 %v616, 16
        %v696 = vrot.slane %v694, 5
        %v697 = vsel %vm635, %v692, %v696
        %v698 = vshrl.u32 %v616, 16
        %v700 = vrot.slane %v698, 4
        %v701 = vor.u32 %v700, %v696
        %v702 = vrot.slane %v701, 4
        %v704 = vshll.u32 %v617, 16
        %v706 = vrot.slane %v704, 5
        %v707 = vsel %vm635, %v702, %v706
        %v709 = vshrl.u32 %v618, 16
        %v711 = vrot.slane %v709, 4
        %v712 = vshll.u32 %v618, 16
        %v714 = vrot.slane %v712, 5
        %v715 = vor.u32 %v711, %v714
        %v716 = vrot.slane %v715, 4
        %v718 = vshll.u32 %v619, 16
        %v720 = vrot.slane %v718, 5
        %v721 = vsel %vm635, %v716, %v720
        %v722 = vshrl.u32 %v619, 16
        %v724 = vrot.slane %v722, 4
        %v725 = vor.u32 %v724, %v720
        %v726 = vrot.slane %v725, 4
        %v728 = vshll.u32 %v620, 16
        %v730 = vrot.slane %v728, 5
        %v731 = vsel %vm635, %v726, %v730
        %v733 = vshrl.u32 %v621, 16
        %v735 = vrot.slane %v733, 4
        %v736 = vshll.u32 %v621, 16
        %v738 = vrot.slane %v736, 5
        %v739 = vor.u32 %v735, %v738
        %v740 = vrot.slane %v739, 4
        %v742 = vshll.u32 %v622, 16
        %v744 = vrot.slane %v742, 5
        %v745 = vsel %vm635, %v740, %v744
        %v746 = vshrl.u32 %v622, 16
        %v748 = vrot.slane %v746, 4
        %v749 = vor.u32 %v748, %v744
        %v750 = vrot.slane %v749, 4
        %v752 = vshll.u32 %v623, 16
        %v754 = vrot.slane %v752, 5
        %v755 = vsel %vm635, %v750, %v754
        %v757 = vshrl.u32 %v624, 16
        %v759 = vrot.slane %v757, 4
        %v760 = vshll.u32 %v624, 16
        %v762 = vrot.slane %v760, 5
        %v763 = vor.u32 %v759, %v762
        %v764 = vrot.slane %v763, 4
        %v766 = vshll.u32 %v625, 16
        %v768 = vrot.slane %v766, 5
        %v769 = vsel %vm635, %v764, %v768
        %v770 = vshrl.u32 %v625, 16
        %v772 = vrot.slane %v770, 4
        %v773 = vor.u32 %v772, %v768
        %v774 = vrot.slane %v773, 4
        %v776 = vshll.u32 %v626, 16
        %v778 = vrot.slane %v776, 5
        %v779 = vsel %vm635, %v774, %v778
        %v781 = vshrl.u32 %v627, 16
        %v783 = vrot.slane %v781, 4
        %v784 = vshll.u32 %v627, 16
        %v786 = vrot.slane %v784, 5
        %v787 = vor.u32 %v783, %v786
        %v788 = vrot.slane %v787, 4
        %v790 = vshll.u32 %v628, 16
        %v792 = vrot.slane %v790, 5
        %v793 = vsel %vm635, %v788, %v792
        %v794 = vshrl.u32 %v628, 16
        %v796 = vrot.slane %v794, 4
        %v797 = vor.u32 %v796, %v792
        %v798 = vrot.slane %v797, 4
        %v800 = vshll.u32 %v629, 16
        %v802 = vrot.slane %v800, 5
        %v803 = vsel %vm635, %v798, %v802
        %v805 = vshrl.u32 %v630, 16
        %v807 = vrot.slane %v805, 4
        %v808 = vshll.u32 %v630, 16
        %v810 = vrot.slane %v808, 5
        %v811 = vor.u32 %v807, %v810
        %v812 = vrot.slane %v811, 4
        %v814 = vshll.u32 %v631, 16
        %v816 = vrot.slane %v814, 5
        %v817 = vsel %vm635, %v812, %v816
        %v818 = vshrl.u32 %v631, 16
        %v820 = vrot.slane %v818, 4
        %v821 = vor.u32 %v820, %v816
        %v822 = vrot.slane %v821, 4
        %v824 = vshll.u32 %v632, 16
        %v826 = vrot.slane %v824, 5
        %v827 = vsel %vm635, %v822, %v826
        %s828 = scalar_lea.vmem %s1, 128
        %v829 = vld [vmem:[%s828] sm:$0xf]
        %v830 = vld [vmem:[%s828 + $0x4] sm:$0xf]
        %v831 = vld [vmem:[%s828 + $0x8] sm:$0xf]
        %v832 = vld [vmem:[%s828 + $0xc] sm:$0xf]
        %v833 = vld [vmem:[%s828 + $0x10] sm:$0xf]
        %v834 = vld [vmem:[%s828 + $0x14] sm:$0xf]
        %v835 = vld [vmem:[%s828 + $0x18] sm:$0xf]
        %v836 = vld [vmem:[%s828 + $0x1c] sm:$0xf]
        %v837 = vld [vmem:[%s828 + $0x20] sm:$0xf]
        %v838 = vld [vmem:[%s828 + $0x24] sm:$0xf]
        %v839 = vld [vmem:[%s828 + $0x28] sm:$0xf]
        %v840 = vld [vmem:[%s828 + $0x2c] sm:$0xf]
        %v841 = vld [vmem:[%s828 + $0x30] sm:$0xf]
        %v842 = vld [vmem:[%s828 + $0x34] sm:$0xf]
        %v843 = vld [vmem:[%s828 + $0x38] sm:$0xf]
        %v844 = vld [vmem:[%s828 + $0x3c] sm:$0xf]
        %v845 = vunpack.c.l.b16 %v649
        %v846 = vunpack.c.l.b16 %v659
        %v847 = vunpack.c.l.b16 %v673
        %v848 = vunpack.c.l.b16 %v683
        %v849 = vunpack.c.l.b16 %v697
        %v850 = vunpack.c.l.b16 %v707
        %v851 = vunpack.c.l.b16 %v721
        %v852 = vunpack.c.l.b16 %v731
        %v853 = vunpack.c.l.b16 %v745
        %v854 = vunpack.c.l.b16 %v755
        %v855 = vunpack.c.l.b16 %v769
        %v856 = vunpack.c.l.b16 %v779
        %v857 = vunpack.c.l.b16 %v793
        %v858 = vunpack.c.l.b16 %v803
        %v859 = vunpack.c.l.b16 %v817
        %v860 = vunpack.c.l.b16 %v827
        %v861 = vpack.c.b16 %v846, %v845
        %v862 = vpack.c.b16 %v848, %v847
        %v863 = vpack.c.b16 %v850, %v849
        %v864 = vpack.c.b16 %v852, %v851
        %v865 = vpack.c.b16 %v854, %v853
        %v866 = vpack.c.b16 %v856, %v855
        %v867 = vpack.c.b16 %v858, %v857
        %v868 = vpack.c.b16 %v860, %v859
        %v893 = vunpack.c.l.b16 %v829
        %v894 = vunpack.c.l.b16 %v830
        %v895 = vunpack.c.l.b16 %v831
        %v896 = vunpack.c.l.b16 %v832
        %v897 = vunpack.c.l.b16 %v833
        %v898 = vunpack.c.l.b16 %v834
        %v899 = vunpack.c.l.b16 %v835
        %v900 = vunpack.c.l.b16 %v836
        %v901 = vunpack.c.l.b16 %v837
        %v902 = vunpack.c.l.b16 %v838
        %v903 = vunpack.c.l.b16 %v839
        %v904 = vunpack.c.l.b16 %v840
        %v905 = vunpack.c.l.b16 %v841
        %v906 = vunpack.c.l.b16 %v842
        %v907 = vunpack.c.l.b16 %v843
        %v908 = vunpack.c.l.b16 %v844
        %v909 = vpack.c.b16 %v894, %v893
        %v910 = vpack.c.b16 %v896, %v895
        %v911 = vpack.c.b16 %v898, %v897
        %v912 = vpack.c.b16 %v900, %v899
        %v913 = vpack.c.b16 %v902, %v901
        %v914 = vpack.c.b16 %v904, %v903
        %v915 = vpack.c.b16 %v906, %v905
        %v916 = vpack.c.b16 %v908, %v907
        %925 = vmatprep.subr.bf16.mxu0 0
        %926 = vmatpush1.bf16.msra.mxu0 %v909
        %927 = vmatprep.subr.bf16.mxu0 0
        %928 = vmatpush1.bf16.msra.mxu0 %v910
        %929 = vmatprep.subr.bf16.mxu0 0
        %930 = vmatpush1.bf16.msra.mxu0 %v911
        %931 = vmatprep.subr.bf16.mxu0 0
        %932 = vmatpush1.bf16.msra.mxu0 %v912
        %933 = vmatprep.subr.bf16.mxu0 0
        %934 = vmatpush1.bf16.msra.mxu0 %v913
        %935 = vmatprep.subr.bf16.mxu0 0
        %936 = vmatpush1.bf16.msra.mxu0 %v914
        %937 = vmatprep.subr.bf16.mxu0 0
        %938 = vmatpush1.bf16.msra.mxu0 %v915
        %939 = vmatprep.subr.bf16.mxu0 0
        %940 = vmatpush1.bf16.msra.mxu0 %v916
        %941 = vmatprep.subr.bf16.mxu0 0
        %942 = vmatpush1.bf16.msra.mxu0 0
        %943 = vmatprep.subr.bf16.mxu0 0
        %944 = vmatpush1.bf16.msra.mxu0 0
        %945 = vmatprep.subr.bf16.mxu0 0
        %946 = vmatpush1.bf16.msra.mxu0 0
        %947 = vmatprep.subr.bf16.mxu0 0
        %948 = vmatpush1.bf16.msra.mxu0 0
        %949 = vmatprep.subr.bf16.mxu0 0
        %950 = vmatpush1.bf16.msra.mxu0 0
        %951 = vmatprep.subr.bf16.mxu0 0
        %952 = vmatpush1.bf16.msra.mxu0 0
        %953 = vmatprep.subr.bf16.mxu0 0
        %954 = vmatpush1.bf16.msra.mxu0 0
        %955 = vmatprep.subr.bf16.mxu0 0
        %956 = vmatpush1.bf16.msra.mxu0 0
        %957 = vmatprep.mubr.bf16.mxu0 0
        %958 = vmatmul.mubr.bf16.gmra.mrb[0].mxu0 %v861
        %v959 = vpop.f32.mrb[0].mxu0
        %v960 = vadd.f32 0.0, %v959
        %v961 = vpop.f32.mrb[0].mxu0
        %v962 = vpop.f32.mrb[0].mxu0
        %v963 = vadd.f32 0.0, %v962
        %v964 = vpop.f32.mrb[0].mxu0
        %965 = vmatprep.mubr.bf16.mxu0 0
        %966 = vmatmul.mubr.bf16.gmra.mrb[0].mxu0 %v862
        %v967 = vpop.f32.mrb[0].mxu0
        %v968 = vadd.f32 0.0, %v967
        %v969 = vpop.f32.mrb[0].mxu0
        %v970 = vpop.f32.mrb[0].mxu0
        %v971 = vadd.f32 0.0, %v970
        %v972 = vpop.f32.mrb[0].mxu0
        %973 = vmatprep.mubr.bf16.mxu0 0
        %974 = vmatmul.mubr.bf16.gmra.mrb[0].mxu0 %v863
        %v975 = vpop.f32.mrb[0].mxu0
        %v976 = vadd.f32 0.0, %v975
        %v977 = vpop.f32.mrb[0].mxu0
        %v978 = vpop.f32.mrb[0].mxu0
        %v979 = vadd.f32 0.0, %v978
        %v980 = vpop.f32.mrb[0].mxu0
        %981 = vmatprep.mubr.bf16.mxu0 0
        %982 = vmatmul.mubr.bf16.gmra.mrb[0].mxu0 %v864
        %v983 = vpop.f32.mrb[0].mxu0
        %v984 = vadd.f32 0.0, %v983
        %v985 = vpop.f32.mrb[0].mxu0
        %v986 = vpop.f32.mrb[0].mxu0
        %v987 = vadd.f32 0.0, %v986
        %v988 = vpop.f32.mrb[0].mxu0
        %989 = vmatprep.mubr.bf16.mxu0 0
        %990 = vmatmul.mubr.bf16.gmra.mrb[0].mxu0 %v865
        %v991 = vpop.f32.mrb[0].mxu0
        %v992 = vadd.f32 0.0, %v991
        %v993 = vpop.f32.mrb[0].mxu0
        %v994 = vpop.f32.mrb[0].mxu0
        %v995 = vadd.f32 0.0, %v994
        %v996 = vpop.f32.mrb[0].mxu0
        %997 = vmatprep.mubr.bf16.mxu0 0
        %998 = vmatmul.mubr.bf16.gmra.mrb[0].mxu0 %v866
        %v999 = vpop.f32.mrb[0].mxu0
        %v1000 = vadd.f32 0.0, %v999
        %v1001 = vpop.f32.mrb[0].mxu0
        %v1002 = vpop.f32.mrb[0].mxu0
        %v1003 = vadd.f32 0.0, %v1002
        %v1004 = vpop.f32.mrb[0].mxu0
        %1005 = vmatprep.mubr.bf16.mxu0 0
        %1006 = vmatmul.mubr.bf16.gmra.mrb[0].mxu0 %v867
        %v1007 = vpop.f32.mrb[0].mxu0
        %v1008 = vadd.f32 0.0, %v1007
        %v1009 = vpop.f32.mrb[0].mxu0
        %v1010 = vpop.f32.mrb[0].mxu0
        %v1011 = vadd.f32 0.0, %v1010
        %v1012 = vpop.f32.mrb[0].mxu0
        %1013 = vmatprep.mubr.bf16.mxu0 0
        %1014 = vmatmul.mubr.bf16.gmra.mrb[0].mxu0 %v868
        %v1015 = vpop.f32.mrb[0].mxu0
        %v1016 = vadd.f32 0.0, %v1015
        %v1017 = vpop.f32.mrb[0].mxu0
        %v1018 = vpop.f32.mrb[0].mxu0
        %v1019 = vadd.f32 0.0, %v1018
        %v1020 = vpop.f32.mrb[0].mxu0
        %1021 = vdwg.mxu0
        %v1022 = vadd.f32 %v547, %v960
        %v1023 = vadd.f32 %v550, %v963
        %v1024 = vadd.f32 %v555, %v968
        %v1025 = vadd.f32 %v558, %v971
        %v1026 = vadd.f32 %v563, %v976
        %v1027 = vadd.f32 %v566, %v979
        %v1028 = vadd.f32 %v571, %v984
        %v1029 = vadd.f32 %v574, %v987
        %v1030 = vadd.f32 %v579, %v992
        %v1031 = vadd.f32 %v582, %v995
        %v1032 = vadd.f32 %v587, %v1000
        %v1033 = vadd.f32 %v590, %v1003
        %v1034 = vadd.f32 %v595, %v1008
        %v1035 = vadd.f32 %v598, %v1011
        %v1036 = vadd.f32 %v603, %v1016
        %v1037 = vadd.f32 %v606, %v1019
        %s1038 = sadd.s32 %s152, 102
        %s1039 = smul.addr %s1038, 4
        %s1040 = scalar_lea.vmem %s0, %s1039
        %v1041 = vld [vmem:[%s1040] sm:$0xf]
        %v1042 = vld [vmem:[%s1040 + $0x4] sm:$0xf]
        %v1043 = vld [vmem:[%s1040 + $0xc] sm:$0xf]
        %v1044 = vld [vmem:[%s1040 + $0x10] sm:$0xf]
        %v1045 = vld [vmem:[%s1040 + $0x18] sm:$0xf]
        %v1046 = vld [vmem:[%s1040 + $0x1c] sm:$0xf]
        %v1047 = vld [vmem:[%s1040 + $0x24] sm:$0xf]
        %v1048 = vld [vmem:[%s1040 + $0x28] sm:$0xf]
        %v1049 = vld [vmem:[%s1040 + $0x30] sm:$0xf]
        %v1050 = vld [vmem:[%s1040 + $0x34] sm:$0xf]
        %v1051 = vld [vmem:[%s1040 + $0x3c] sm:$0xf]
        %v1052 = vld [vmem:[%s1040 + $0x40] sm:$0xf]
        %v1053 = vld [vmem:[%s1040 + $0x48] sm:$0xf]
        %v1054 = vld [vmem:[%s1040 + $0x4c] sm:$0xf]
        %v1055 = vld [vmem:[%s1040 + $0x54] sm:$0xf]
        %v1056 = vld [vmem:[%s1040 + $0x58] sm:$0xf]
        %s1057 = scalar_lea.vmem %s1, 192
        %v1058 = vld [vmem:[%s1057] sm:$0xf]
        %v1059 = vld [vmem:[%s1057 + $0x4] sm:$0xf]
        %v1060 = vld [vmem:[%s1057 + $0x8] sm:$0xf]
        %v1061 = vld [vmem:[%s1057 + $0xc] sm:$0xf]
        %v1062 = vld [vmem:[%s1057 + $0x10] sm:$0xf]
        %v1063 = vld [vmem:[%s1057 + $0x14] sm:$0xf]
        %v1064 = vld [vmem:[%s1057 + $0x18] sm:$0xf]
        %v1065 = vld [vmem:[%s1057 + $0x1c] sm:$0xf]
        %v1066 = vld [vmem:[%s1057 + $0x20] sm:$0xf]
        %v1067 = vld [vmem:[%s1057 + $0x24] sm:$0xf]
        %v1068 = vld [vmem:[%s1057 + $0x28] sm:$0xf]
        %v1069 = vld [vmem:[%s1057 + $0x2c] sm:$0xf]
        %v1070 = vld [vmem:[%s1057 + $0x30] sm:$0xf]
        %v1071 = vld [vmem:[%s1057 + $0x34] sm:$0xf]
        %v1072 = vld [vmem:[%s1057 + $0x38] sm:$0xf]
        %v1073 = vld [vmem:[%s1057 + $0x3c] sm:$0xf]
        %v1090 = vunpack.c.l.b16 %v1041
        %v1091 = vunpack.c.l.b16 %v1042
        %v1092 = vunpack.c.l.b16 %v1043
        %v1093 = vunpack.c.l.b16 %v1044
        %v1094 = vunpack.c.l.b16 %v1045
        %v1095 = vunpack.c.l.b16 %v1046
        %v1096 = vunpack.c.l.b16 %v1047
        %v1097 = vunpack.c.l.b16 %v1048
        %v1098 = vunpack.c.l.b16 %v1049
        %v1099 = vunpack.c.l.b16 %v1050
        %v1100 = vunpack.c.l.b16 %v1051
        %v1101 = vunpack.c.l.b16 %v1052
        %v1102 = vunpack.c.l.b16 %v1053
        %v1103 = vunpack.c.l.b16 %v1054
        %v1104 = vunpack.c.l.b16 %v1055
        %v1105 = vunpack.c.l.b16 %v1056
        %v1106 = vpack.c.b16 %v1091, %v1090
        %v1107 = vpack.c.b16 %v1093, %v1092
        %v1108 = vpack.c.b16 %v1095, %v1094
        %v1109 = vpack.c.b16 %v1097, %v1096
        %v1110 = vpack.c.b16 %v1099, %v1098
        %v1111 = vpack.c.b16 %v1101, %v1100
        %v1112 = vpack.c.b16 %v1103, %v1102
        %v1113 = vpack.c.b16 %v1105, %v1104
        %v1138 = vunpack.c.l.b16 %v1058
        %v1139 = vunpack.c.l.b16 %v1059
        %v1140 = vunpack.c.l.b16 %v1060
        %v1141 = vunpack.c.l.b16 %v1061
        %v1142 = vunpack.c.l.b16 %v1062
        %v1143 = vunpack.c.l.b16 %v1063
        %v1144 = vunpack.c.l.b16 %v1064
        %v1145 = vunpack.c.l.b16 %v1065
        %v1146 = vunpack.c.l.b16 %v1066
        %v1147 = vunpack.c.l.b16 %v1067
        %v1148 = vunpack.c.l.b16 %v1068
        %v1149 = vunpack.c.l.b16 %v1069
        %v1150 = vunpack.c.l.b16 %v1070
        %v1151 = vunpack.c.l.b16 %v1071
        %v1152 = vunpack.c.l.b16 %v1072
        %v1153 = vunpack.c.l.b16 %v1073
        %v1154 = vpack.c.b16 %v1139, %v1138
        %v1155 = vpack.c.b16 %v1141, %v1140
        %v1156 = vpack.c.b16 %v1143, %v1142
        %v1157 = vpack.c.b16 %v1145, %v1144
        %v1158 = vpack.c.b16 %v1147, %v1146
        %v1159 = vpack.c.b16 %v1149, %v1148
        %v1160 = vpack.c.b16 %v1151, %v1150
        %v1161 = vpack.c.b16 %v1153, %v1152
        %1170 = vmatprep.subr.bf16.mxu0 0
        %1171 = vmatpush1.bf16.msra.mxu0 %v1154
        %1172 = vmatprep.subr.bf16.mxu0 0
        %1173 = vmatpush1.bf16.msra.mxu0 %v1155
        %1174 = vmatprep.subr.bf16.mxu0 0
        %1175 = vmatpush1.bf16.msra.mxu0 %v1156
        %1176 = vmatprep.subr.bf16.mxu0 0
        %1177 = vmatpush1.bf16.msra.mxu0 %v1157
        %1178 = vmatprep.subr.bf16.mxu0 0
        %1179 = vmatpush1.bf16.msra.mxu0 %v1158
        %1180 = vmatprep.subr.bf16.mxu0 0
        %1181 = vmatpush1.bf16.msra.mxu0 %v1159
        %1182 = vmatprep.subr.bf16.mxu0 0
        %1183 = vmatpush1.bf16.msra.mxu0 %v1160
        %1184 = vmatprep.subr.bf16.mxu0 0
        %1185 = vmatpush1.bf16.msra.mxu0 %v1161
        %1186 = vmatprep.subr.bf16.mxu0 0
        %1187 = vmatpush1.bf16.msra.mxu0 0
        %1188 = vmatprep.subr.bf16.mxu0 0
        %1189 = vmatpush1.bf16.msra.mxu0 0
        %1190 = vmatprep.subr.bf16.mxu0 0
        %1191 = vmatpush1.bf16.msra.mxu0 0
        %1192 = vmatprep.subr.bf16.mxu0 0
        %1193 = vmatpush1.bf16.msra.mxu0 0
        %1194 = vmatprep.subr.bf16.mxu0 0
        %1195 = vmatpush1.bf16.msra.mxu0 0
        %1196 = vmatprep.subr.bf16.mxu0 0
        %1197 = vmatpush1.bf16.msra.mxu0 0
        %1198 = vmatprep.subr.bf16.mxu0 0
        %1199 = vmatpush1.bf16.msra.mxu0 0
        %1200 = vmatprep.subr.bf16.mxu0 0
        %1201 = vmatpush1.bf16.msra.mxu0 0
        %1202 = vmatprep.mubr.bf16.mxu0 0
        %1203 = vmatmul.mubr.bf16.gmra.mrb[0].mxu0 %v1106
        %v1204 = vpop.f32.mrb[0].mxu0
        %v1205 = vadd.f32 0.0, %v1204
        %v1206 = vpop.f32.mrb[0].mxu0
        %v1207 = vpop.f32.mrb[0].mxu0
        %v1208 = vadd.f32 0.0, %v1207
        %v1209 = vpop.f32.mrb[0].mxu0
        %1210 = vmatprep.mubr.bf16.mxu0 0
        %1211 = vmatmul.mubr.bf16.gmra.mrb[0].mxu0 %v1107
        %v1212 = vpop.f32.mrb[0].mxu0
        %v1213 = vadd.f32 0.0, %v1212
        %v1214 = vpop.f32.mrb[0].mxu0
        %v1215 = vpop.f32.mrb[0].mxu0
        %v1216 = vadd.f32 0.0, %v1215
        %v1217 = vpop.f32.mrb[0].mxu0
        %1218 = vmatprep.mubr.bf16.mxu0 0
        %1219 = vmatmul.mubr.bf16.gmra.mrb[0].mxu0 %v1108
        %v1220 = vpop.f32.mrb[0].mxu0
        %v1221 = vadd.f32 0.0, %v1220
        %v1222 = vpop.f32.mrb[0].mxu0
        %v1223 = vpop.f32.mrb[0].mxu0
        %v1224 = vadd.f32 0.0, %v1223
        %v1225 = vpop.f32.mrb[0].mxu0
        %1226 = vmatprep.mubr.bf16.mxu0 0
        %1227 = vmatmul.mubr.bf16.gmra.mrb[0].mxu0 %v1109
        %v1228 = vpop.f32.mrb[0].mxu0
        %v1229 = vadd.f32 0.0, %v1228
        %v1230 = vpop.f32.mrb[0].mxu0
        %v1231 = vpop.f32.mrb[0].mxu0
        %v1232 = vadd.f32 0.0, %v1231
        %v1233 = vpop.f32.mrb[0].mxu0
        %1234 = vmatprep.mubr.bf16.mxu0 0
        %1235 = vmatmul.mubr.bf16.gmra.mrb[0].mxu0 %v1110
        %v1236 = vpop.f32.mrb[0].mxu0
        %v1237 = vadd.f32 0.0, %v1236
        %v1238 = vpop.f32.mrb[0].mxu0
        %v1239 = vpop.f32.mrb[0].mxu0
        %v1240 = vadd.f32 0.0, %v1239
        %v1241 = vpop.f32.mrb[0].mxu0
        %1242 = vmatprep.mubr.bf16.mxu0 0
        %1243 = vmatmul.mubr.bf16.gmra.mrb[0].mxu0 %v1111
        %v1244 = vpop.f32.mrb[0].mxu0
        %v1245 = vadd.f32 0.0, %v1244
        %v1246 = vpop.f32.mrb[0].mxu0
        %v1247 = vpop.f32.mrb[0].mxu0
        %v1248 = vadd.f32 0.0, %v1247
        %v1249 = vpop.f32.mrb[0].mxu0
        %1250 = vmatprep.mubr.bf16.mxu0 0
        %1251 = vmatmul.mubr.bf16.gmra.mrb[0].mxu0 %v1112
        %v1252 = vpop.f32.mrb[0].mxu0
        %v1253 = vadd.f32 0.0, %v1252
        %v1254 = vpop.f32.mrb[0].mxu0
        %v1255 = vpop.f32.mrb[0].mxu0
        %v1256 = vadd.f32 0.0, %v1255
        %v1257 = vpop.f32.mrb[0].mxu0
        %1258 = vmatprep.mubr.bf16.mxu0 0
        %1259 = vmatmul.mubr.bf16.gmra.mrb[0].mxu0 %v1113
        %v1260 = vpop.f32.mrb[0].mxu0
        %v1261 = vadd.f32 0.0, %v1260
        %v1262 = vpop.f32.mrb[0].mxu0
        %v1263 = vpop.f32.mrb[0].mxu0
        %v1264 = vadd.f32 0.0, %v1263
        %v1265 = vpop.f32.mrb[0].mxu0
        %1266 = vdwg.mxu0
        %v1267 = vadd.f32 %v1022, %v1205
        %v1268 = vadd.f32 %v1023, %v1208
        %v1269 = vadd.f32 %v1024, %v1213
        %v1270 = vadd.f32 %v1025, %v1216
        %v1271 = vadd.f32 %v1026, %v1221
        %v1272 = vadd.f32 %v1027, %v1224
        %v1273 = vadd.f32 %v1028, %v1229
        %v1274 = vadd.f32 %v1029, %v1232
        %v1275 = vadd.f32 %v1030, %v1237
        %v1276 = vadd.f32 %v1031, %v1240
        %v1277 = vadd.f32 %v1032, %v1245
        %v1278 = vadd.f32 %v1033, %v1248
        %v1279 = vadd.f32 %v1034, %v1253
        %v1280 = vadd.f32 %v1035, %v1256
        %v1281 = vadd.f32 %v1036, %v1261
        %v1282 = vadd.f32 %v1037, %v1264
        %s1283 = sadd.s32 %s152, 153
        %s1284 = smul.addr %s1283, 4
        %s1285 = scalar_lea.vmem %s0, %s1284
        %v1286 = vld [vmem:[%s1285] sm:$0xf]
        %v1287 = vld [vmem:[%s1285 + $0x4] sm:$0xf]
        %v1288 = vld [vmem:[%s1285 + $0xc] sm:$0xf]
        %v1289 = vld [vmem:[%s1285 + $0x10] sm:$0xf]
        %v1290 = vld [vmem:[%s1285 + $0x18] sm:$0xf]
        %v1291 = vld [vmem:[%s1285 + $0x1c] sm:$0xf]
        %v1292 = vld [vmem:[%s1285 + $0x24] sm:$0xf]
        %v1293 = vld [vmem:[%s1285 + $0x28] sm:$0xf]
        %v1294 = vld [vmem:[%s1285 + $0x30] sm:$0xf]
        %v1295 = vld [vmem:[%s1285 + $0x34] sm:$0xf]
        %v1296 = vld [vmem:[%s1285 + $0x3c] sm:$0xf]
        %v1297 = vld [vmem:[%s1285 + $0x40] sm:$0xf]
        %v1298 = vld [vmem:[%s1285 + $0x48] sm:$0xf]
        %v1299 = vld [vmem:[%s1285 + $0x4c] sm:$0xf]
        %v1300 = vld [vmem:[%s1285 + $0x54] sm:$0xf]
        %v1301 = vld [vmem:[%s1285 + $0x58] sm:$0xf]
        %s1302 = scalar_lea.vmem %s1, 256
        %v1303 = vld [vmem:[%s1302] sm:$0xf]
        %v1304 = vld [vmem:[%s1302 + $0x4] sm:$0xf]
        %v1305 = vld [vmem:[%s1302 + $0x8] sm:$0xf]
        %v1306 = vld [vmem:[%s1302 + $0xc] sm:$0xf]
        %v1307 = vld [vmem:[%s1302 + $0x10] sm:$0xf]
        %v1308 = vld [vmem:[%s1302 + $0x14] sm:$0xf]
        %v1309 = vld [vmem:[%s1302 + $0x18] sm:$0xf]
        %v1310 = vld [vmem:[%s1302 + $0x1c] sm:$0xf]
        %v1311 = vld [vmem:[%s1302 + $0x20] sm:$0xf]
        %v1312 = vld [vmem:[%s1302 + $0x24] sm:$0xf]
        %v1313 = vld [vmem:[%s1302 + $0x28] sm:$0xf]
        %v1314 = vld [vmem:[%s1302 + $0x2c] sm:$0xf]
        %v1315 = vld [vmem:[%s1302 + $0x30] sm:$0xf]
        %v1316 = vld [vmem:[%s1302 + $0x34] sm:$0xf]
        %v1317 = vld [vmem:[%s1302 + $0x38] sm:$0xf]
        %v1318 = vld [vmem:[%s1302 + $0x3c] sm:$0xf]
        %v1335 = vunpack.c.l.b16 %v1286
        %v1336 = vunpack.c.l.b16 %v1287
        %v1337 = vunpack.c.l.b16 %v1288
        %v1338 = vunpack.c.l.b16 %v1289
        %v1339 = vunpack.c.l.b16 %v1290
        %v1340 = vunpack.c.l.b16 %v1291
        %v1341 = vunpack.c.l.b16 %v1292
        %v1342 = vunpack.c.l.b16 %v1293
        %v1343 = vunpack.c.l.b16 %v1294
        %v1344 = vunpack.c.l.b16 %v1295
        %v1345 = vunpack.c.l.b16 %v1296
        %v1346 = vunpack.c.l.b16 %v1297
        %v1347 = vunpack.c.l.b16 %v1298
        %v1348 = vunpack.c.l.b16 %v1299
        %v1349 = vunpack.c.l.b16 %v1300
        %v1350 = vunpack.c.l.b16 %v1301
        %v1351 = vpack.c.b16 %v1336, %v1335
        %v1352 = vpack.c.b16 %v1338, %v1337
        %v1353 = vpack.c.b16 %v1340, %v1339
        %v1354 = vpack.c.b16 %v1342, %v1341
        %v1355 = vpack.c.b16 %v1344, %v1343
        %v1356 = vpack.c.b16 %v1346, %v1345
        %v1357 = vpack.c.b16 %v1348, %v1347
        %v1358 = vpack.c.b16 %v1350, %v1349
        %v1383 = vunpack.c.l.b16 %v1303
        %v1384 = vunpack.c.l.b16 %v1304
        %v1385 = vunpack.c.l.b16 %v1305
        %v1386 = vunpack.c.l.b16 %v1306
        %v1387 = vunpack.c.l.b16 %v1307
        %v1388 = vunpack.c.l.b16 %v1308
        %v1389 = vunpack.c.l.b16 %v1309
        %v1390 = vunpack.c.l.b16 %v1310
        %v1391 = vunpack.c.l.b16 %v1311
        %v1392 = vunpack.c.l.b16 %v1312
        %v1393 = vunpack.c.l.b16 %v1313
        %v1394 = vunpack.c.l.b16 %v1314
        %v1395 = vunpack.c.l.b16 %v1315
        %v1396 = vunpack.c.l.b16 %v1316
        %v1397 = vunpack.c.l.b16 %v1317
        %v1398 = vunpack.c.l.b16 %v1318
        %v1399 = vpack.c.b16 %v1384, %v1383
        %v1400 = vpack.c.b16 %v1386, %v1385
        %v1401 = vpack.c.b16 %v1388, %v1387
        %v1402 = vpack.c.b16 %v1390, %v1389
        %v1403 = vpack.c.b16 %v1392, %v1391
        %v1404 = vpack.c.b16 %v1394, %v1393
        %v1405 = vpack.c.b16 %v1396, %v1395
        %v1406 = vpack.c.b16 %v1398, %v1397
        %1415 = vmatprep.subr.bf16.mxu0 0
        %1416 = vmatpush1.bf16.msra.mxu0 %v1399
        %1417 = vmatprep.subr.bf16.mxu0 0
        %1418 = vmatpush1.bf16.msra.mxu0 %v1400
        %1419 = vmatprep.subr.bf16.mxu0 0
        %1420 = vmatpush1.bf16.msra.mxu0 %v1401
        %1421 = vmatprep.subr.bf16.mxu0 0
        %1422 = vmatpush1.bf16.msra.mxu0 %v1402
        %1423 = vmatprep.subr.bf16.mxu0 0
        %1424 = vmatpush1.bf16.msra.mxu0 %v1403
        %1425 = vmatprep.subr.bf16.mxu0 0
        %1426 = vmatpush1.bf16.msra.mxu0 %v1404
        %1427 = vmatprep.subr.bf16.mxu0 0
        %1428 = vmatpush1.bf16.msra.mxu0 %v1405
        %1429 = vmatprep.subr.bf16.mxu0 0
        %1430 = vmatpush1.bf16.msra.mxu0 %v1406
        %1431 = vmatprep.subr.bf16.mxu0 0
        %1432 = vmatpush1.bf16.msra.mxu0 0
        %1433 = vmatprep.subr.bf16.mxu0 0
        %1434 = vmatpush1.bf16.msra.mxu0 0
        %1435 = vmatprep.subr.bf16.mxu0 0
        %1436 = vmatpush1.bf16.msra.mxu0 0
        %1437 = vmatprep.subr.bf16.mxu0 0
        %1438 = vmatpush1.bf16.msra.mxu0 0
        %1439 = vmatprep.subr.bf16.mxu0 0
        %1440 = vmatpush1.bf16.msra.mxu0 0
        %1441 = vmatprep.subr.bf16.mxu0 0
        %1442 = vmatpush1.bf16.msra.mxu0 0
        %1443 = vmatprep.subr.bf16.mxu0 0
        %1444 = vmatpush1.bf16.msra.mxu0 0
        %1445 = vmatprep.subr.bf16.mxu0 0
        %1446 = vmatpush1.bf16.msra.mxu0 0
        %1447 = vmatprep.mubr.bf16.mxu0 0
        %1448 = vmatmul.mubr.bf16.gmra.mrb[0].mxu0 %v1351
        %v1449 = vpop.f32.mrb[0].mxu0
        %v1450 = vadd.f32 0.0, %v1449
        %v1451 = vpop.f32.mrb[0].mxu0
        %v1452 = vpop.f32.mrb[0].mxu0
        %v1453 = vadd.f32 0.0, %v1452
        %v1454 = vpop.f32.mrb[0].mxu0
        %1455 = vmatprep.mubr.bf16.mxu0 0
        %1456 = vmatmul.mubr.bf16.gmra.mrb[0].mxu0 %v1352
        %v1457 = vpop.f32.mrb[0].mxu0
        %v1458 = vadd.f32 0.0, %v1457
        %v1459 = vpop.f32.mrb[0].mxu0
        %v1460 = vpop.f32.mrb[0].mxu0
        %v1461 = vadd.f32 0.0, %v1460
        %v1462 = vpop.f32.mrb[0].mxu0
        %1463 = vmatprep.mubr.bf16.mxu0 0
        %1464 = vmatmul.mubr.bf16.gmra.mrb[0].mxu0 %v1353
        %v1465 = vpop.f32.mrb[0].mxu0
        %v1466 = vadd.f32 0.0, %v1465
        %v1467 = vpop.f32.mrb[0].mxu0
        %v1468 = vpop.f32.mrb[0].mxu0
        %v1469 = vadd.f32 0.0, %v1468
        %v1470 = vpop.f32.mrb[0].mxu0
        %1471 = vmatprep.mubr.bf16.mxu0 0
        %1472 = vmatmul.mubr.bf16.gmra.mrb[0].mxu0 %v1354
        %v1473 = vpop.f32.mrb[0].mxu0
        %v1474 = vadd.f32 0.0, %v1473
        %v1475 = vpop.f32.mrb[0].mxu0
        %v1476 = vpop.f32.mrb[0].mxu0
        %v1477 = vadd.f32 0.0, %v1476
        %v1478 = vpop.f32.mrb[0].mxu0
        %1479 = vmatprep.mubr.bf16.mxu0 0
        %1480 = vmatmul.mubr.bf16.gmra.mrb[0].mxu0 %v1355
        %v1481 = vpop.f32.mrb[0].mxu0
        %v1482 = vadd.f32 0.0, %v1481
        %v1483 = vpop.f32.mrb[0].mxu0
        %v1484 = vpop.f32.mrb[0].mxu0
        %v1485 = vadd.f32 0.0, %v1484
        %v1486 = vpop.f32.mrb[0].mxu0
        %1487 = vmatprep.mubr.bf16.mxu0 0
        %1488 = vmatmul.mubr.bf16.gmra.mrb[0].mxu0 %v1356
        %v1489 = vpop.f32.mrb[0].mxu0
        %v1490 = vadd.f32 0.0, %v1489
        %v1491 = vpop.f32.mrb[0].mxu0
        %v1492 = vpop.f32.mrb[0].mxu0
        %v1493 = vadd.f32 0.0, %v1492
        %v1494 = vpop.f32.mrb[0].mxu0
        %1495 = vmatprep.mubr.bf16.mxu0 0
        %1496 = vmatmul.mubr.bf16.gmra.mrb[0].mxu0 %v1357
        %v1497 = vpop.f32.mrb[0].mxu0
        %v1498 = vadd.f32 0.0, %v1497
        %v1499 = vpop.f32.mrb[0].mxu0
        %v1500 = vpop.f32.mrb[0].mxu0
        %v1501 = vadd.f32 0.0, %v1500
        %v1502 = vpop.f32.mrb[0].mxu0
        %1503 = vmatprep.mubr.bf16.mxu0 0
        %1504 = vmatmul.mubr.bf16.gmra.mrb[0].mxu0 %v1358
        %v1505 = vpop.f32.mrb[0].mxu0
        %v1506 = vadd.f32 0.0, %v1505
        %v1507 = vpop.f32.mrb[0].mxu0
        %v1508 = vpop.f32.mrb[0].mxu0
        %v1509 = vadd.f32 0.0, %v1508
        %v1510 = vpop.f32.mrb[0].mxu0
        %1511 = vdwg.mxu0
        %v1512 = vadd.f32 %v1267, %v1450
        %v1513 = vadd.f32 %v1268, %v1453
        %v1514 = vadd.f32 %v1269, %v1458
        %v1515 = vadd.f32 %v1270, %v1461
        %v1516 = vadd.f32 %v1271, %v1466
        %v1517 = vadd.f32 %v1272, %v1469
        %v1518 = vadd.f32 %v1273, %v1474
        %v1519 = vadd.f32 %v1274, %v1477
        %v1520 = vadd.f32 %v1275, %v1482
        %v1521 = vadd.f32 %v1276, %v1485
        %v1522 = vadd.f32 %v1277, %v1490
        %v1523 = vadd.f32 %v1278, %v1493
        %v1524 = vadd.f32 %v1279, %v1498
        %v1525 = vadd.f32 %v1280, %v1501
        %v1526 = vadd.f32 %v1281, %v1506
        %v1527 = vadd.f32 %v1282, %v1509
        %v1528 = vld [vmem:[%s1040] sm:$0xf]
        %v1529 = vld [vmem:[%s1040 + $0x4] sm:$0xf]
        %v1530 = vld [vmem:[%s1040 + $0x8] sm:$0x1]
        %v1531 = vld [vmem:[%s1040 + $0xc] sm:$0xf]
        %v1532 = vld [vmem:[%s1040 + $0x10] sm:$0xf]
        %v1533 = vld [vmem:[%s1040 + $0x14] sm:$0x1]
        %v1534 = vld [vmem:[%s1040 + $0x18] sm:$0xf]
        %v1535 = vld [vmem:[%s1040 + $0x1c] sm:$0xf]
        %v1536 = vld [vmem:[%s1040 + $0x20] sm:$0x1]
        %v1537 = vld [vmem:[%s1040 + $0x24] sm:$0xf]
        %v1538 = vld [vmem:[%s1040 + $0x28] sm:$0xf]
        %v1539 = vld [vmem:[%s1040 + $0x2c] sm:$0x1]
        %v1540 = vld [vmem:[%s1040 + $0x30] sm:$0xf]
        %v1541 = vld [vmem:[%s1040 + $0x34] sm:$0xf]
        %v1542 = vld [vmem:[%s1040 + $0x38] sm:$0x1]
        %v1543 = vld [vmem:[%s1040 + $0x3c] sm:$0xf]
        %v1544 = vld [vmem:[%s1040 + $0x40] sm:$0xf]
        %v1545 = vld [vmem:[%s1040 + $0x44] sm:$0x1]
        %v1546 = vld [vmem:[%s1040 + $0x48] sm:$0xf]
        %v1547 = vld [vmem:[%s1040 + $0x4c] sm:$0xf]
        %v1548 = vld [vmem:[%s1040 + $0x50] sm:$0x1]
        %v1549 = vld [vmem:[%s1040 + $0x54] sm:$0xf]
        %v1550 = vld [vmem:[%s1040 + $0x58] sm:$0xf]
        %v1551 = vld [vmem:[%s1040 + $0x5c] sm:$0x1]
        %v1553 = vshrl.u32 %v1528, 16
        %v1555 = vrot.slane %v1553, 4
        %v1556 = vshll.u32 %v1528, 16
        %v1558 = vrot.slane %v1556, 5
        %v1559 = vor.u32 %v1555, %v1558
        %v1560 = vrot.slane %v1559, 4
        %v1562 = vshll.u32 %v1529, 16
        %v1564 = vrot.slane %v1562, 5
        %v1565 = vsel %vm635, %v1560, %v1564
        %v1566 = vshrl.u32 %v1529, 16
        %v1568 = vrot.slane %v1566, 4
        %v1569 = vor.u32 %v1568, %v1564
        %v1570 = vrot.slane %v1569, 4
        %v1572 = vshll.u32 %v1530, 16
        %v1574 = vrot.slane %v1572, 5
        %v1575 = vsel %vm635, %v1570, %v1574
        %v1577 = vshrl.u32 %v1531, 16
        %v1579 = vrot.slane %v1577, 4
        %v1580 = vshll.u32 %v1531, 16
        %v1582 = vrot.slane %v1580, 5
        %v1583 = vor.u32 %v1579, %v1582
        %v1584 = vrot.slane %v1583, 4
        %v1586 = vshll.u32 %v1532, 16
        %v1588 = vrot.slane %v1586, 5
        %v1589 = vsel %vm635, %v1584, %v1588
        %v1590 = vshrl.u32 %v1532, 16
        %v1592 = vrot.slane %v1590, 4
        %v1593 = vor.u32 %v1592, %v1588
        %v1594 = vrot.slane %v1593, 4
        %v1596 = vshll.u32 %v1533, 16
        %v1598 = vrot.slane %v1596, 5
        %v1599 = vsel %vm635, %v1594, %v1598
        %v1601 = vshrl.u32 %v1534, 16
        %v1603 = vrot.slane %v1601, 4
        %v1604 = vshll.u32 %v1534, 16
        %v1606 = vrot.slane %v1604, 5
        %v1607 = vor.u32 %v1603, %v1606
        %v1608 = vrot.slane %v1607, 4
        %v1610 = vshll.u32 %v1535, 16
        %v1612 = vrot.slane %v1610, 5
        %v1613 = vsel %vm635, %v1608, %v1612
        %v1614 = vshrl.u32 %v1535, 16
        %v1616 = vrot.slane %v1614, 4
        %v1617 = vor.u32 %v1616, %v1612
        %v1618 = vrot.slane %v1617, 4
        %v1620 = vshll.u32 %v1536, 16
        %v1622 = vrot.slane %v1620, 5
        %v1623 = vsel %vm635, %v1618, %v1622
        %v1625 = vshrl.u32 %v1537, 16
        %v1627 = vrot.slane %v1625, 4
        %v1628 = vshll.u32 %v1537, 16
        %v1630 = vrot.slane %v1628, 5
        %v1631 = vor.u32 %v1627, %v1630
        %v1632 = vrot.slane %v1631, 4
        %v1634 = vshll.u32 %v1538, 16
        %v1636 = vrot.slane %v1634, 5
        %v1637 = vsel %vm635, %v1632, %v1636
        %v1638 = vshrl.u32 %v1538, 16
        %v1640 = vrot.slane %v1638, 4
        %v1641 = vor.u32 %v1640, %v1636
        %v1642 = vrot.slane %v1641, 4
        %v1644 = vshll.u32 %v1539, 16
        %v1646 = vrot.slane %v1644, 5
        %v1647 = vsel %vm635, %v1642, %v1646
        %v1649 = vshrl.u32 %v1540, 16
        %v1651 = vrot.slane %v1649, 4
        %v1652 = vshll.u32 %v1540, 16
        %v1654 = vrot.slane %v1652, 5
        %v1655 = vor.u32 %v1651, %v1654
        %v1656 = vrot.slane %v1655, 4
        %v1658 = vshll.u32 %v1541, 16
        %v1660 = vrot.slane %v1658, 5
        %v1661 = vsel %vm635, %v1656, %v1660
        %v1662 = vshrl.u32 %v1541, 16
        %v1664 = vrot.slane %v1662, 4
        %v1665 = vor.u32 %v1664, %v1660
        %v1666 = vrot.slane %v1665, 4
        %v1668 = vshll.u32 %v1542, 16
        %v1670 = vrot.slane %v1668, 5
        %v1671 = vsel %vm635, %v1666, %v1670
        %v1673 = vshrl.u32 %v1543, 16
        %v1675 = vrot.slane %v1673, 4
        %v1676 = vshll.u32 %v1543, 16
        %v1678 = vrot.slane %v1676, 5
        %v1679 = vor.u32 %v1675, %v1678
        %v1680 = vrot.slane %v1679, 4
        %v1682 = vshll.u32 %v1544, 16
        %v1684 = vrot.slane %v1682, 5
        %v1685 = vsel %vm635, %v1680, %v1684
        %v1686 = vshrl.u32 %v1544, 16
        %v1688 = vrot.slane %v1686, 4
        %v1689 = vor.u32 %v1688, %v1684
        %v1690 = vrot.slane %v1689, 4
        %v1692 = vshll.u32 %v1545, 16
        %v1694 = vrot.slane %v1692, 5
        %v1695 = vsel %vm635, %v1690, %v1694
        %v1697 = vshrl.u32 %v1546, 16
        %v1699 = vrot.slane %v1697, 4
        %v1700 = vshll.u32 %v1546, 16
        %v1702 = vrot.slane %v1700, 5
        %v1703 = vor.u32 %v1699, %v1702
        %v1704 = vrot.slane %v1703, 4
        %v1706 = vshll.u32 %v1547, 16
        %v1708 = vrot.slane %v1706, 5
        %v1709 = vsel %vm635, %v1704, %v1708
        %v1710 = vshrl.u32 %v1547, 16
        %v1712 = vrot.slane %v1710, 4
        %v1713 = vor.u32 %v1712, %v1708
        %v1714 = vrot.slane %v1713, 4
        %v1716 = vshll.u32 %v1548, 16
        %v1718 = vrot.slane %v1716, 5
        %v1719 = vsel %vm635, %v1714, %v1718
        %v1721 = vshrl.u32 %v1549, 16
        %v1723 = vrot.slane %v1721, 4
        %v1724 = vshll.u32 %v1549, 16
        %v1726 = vrot.slane %v1724, 5
        %v1727 = vor.u32 %v1723, %v1726
        %v1728 = vrot.slane %v1727, 4
        %v1730 = vshll.u32 %v1550, 16
        %v1732 = vrot.slane %v1730, 5
        %v1733 = vsel %vm635, %v1728, %v1732
        %v1734 = vshrl.u32 %v1550, 16
        %v1736 = vrot.slane %v1734, 4
        %v1737 = vor.u32 %v1736, %v1732
        %v1738 = vrot.slane %v1737, 4
        %v1740 = vshll.u32 %v1551, 16
        %v1742 = vrot.slane %v1740, 5
        %v1743 = vsel %vm635, %v1738, %v1742
        %s1744 = scalar_lea.vmem %s1, 320
        %v1745 = vld [vmem:[%s1744] sm:$0xf]
        %v1746 = vld [vmem:[%s1744 + $0x4] sm:$0xf]
        %v1747 = vld [vmem:[%s1744 + $0x8] sm:$0xf]
        %v1748 = vld [vmem:[%s1744 + $0xc] sm:$0xf]
        %v1749 = vld [vmem:[%s1744 + $0x10] sm:$0xf]
        %v1750 = vld [vmem:[%s1744 + $0x14] sm:$0xf]
        %v1751 = vld [vmem:[%s1744 + $0x18] sm:$0xf]
        %v1752 = vld [vmem:[%s1744 + $0x1c] sm:$0xf]
        %v1753 = vld [vmem:[%s1744 + $0x20] sm:$0xf]
        %v1754 = vld [vmem:[%s1744 + $0x24] sm:$0xf]
        %v1755 = vld [vmem:[%s1744 + $0x28] sm:$0xf]
        %v1756 = vld [vmem:[%s1744 + $0x2c] sm:$0xf]
        %v1757 = vld [vmem:[%s1744 + $0x30] sm:$0xf]
        %v1758 = vld [vmem:[%s1744 + $0x34] sm:$0xf]
        %v1759 = vld [vmem:[%s1744 + $0x38] sm:$0xf]
        %v1760 = vld [vmem:[%s1744 + $0x3c] sm:$0xf]
        %v1761 = vunpack.c.l.b16 %v1565
        %v1762 = vunpack.c.l.b16 %v1575
        %v1763 = vunpack.c.l.b16 %v1589
        %v1764 = vunpack.c.l.b16 %v1599
        %v1765 = vunpack.c.l.b16 %v1613
        %v1766 = vunpack.c.l.b16 %v1623
        %v1767 = vunpack.c.l.b16 %v1637
        %v1768 = vunpack.c.l.b16 %v1647
        %v1769 = vunpack.c.l.b16 %v1661
        %v1770 = vunpack.c.l.b16 %v1671
        %v1771 = vunpack.c.l.b16 %v1685
        %v1772 = vunpack.c.l.b16 %v1695
        %v1773 = vunpack.c.l.b16 %v1709
        %v1774 = vunpack.c.l.b16 %v1719
        %v1775 = vunpack.c.l.b16 %v1733
        %v1776 = vunpack.c.l.b16 %v1743
        %v1777 = vpack.c.b16 %v1762, %v1761
        %v1778 = vpack.c.b16 %v1764, %v1763
        %v1779 = vpack.c.b16 %v1766, %v1765
        %v1780 = vpack.c.b16 %v1768, %v1767
        %v1781 = vpack.c.b16 %v1770, %v1769
        %v1782 = vpack.c.b16 %v1772, %v1771
        %v1783 = vpack.c.b16 %v1774, %v1773
        %v1784 = vpack.c.b16 %v1776, %v1775
        %v1809 = vunpack.c.l.b16 %v1745
        %v1810 = vunpack.c.l.b16 %v1746
        %v1811 = vunpack.c.l.b16 %v1747
        %v1812 = vunpack.c.l.b16 %v1748
        %v1813 = vunpack.c.l.b16 %v1749
        %v1814 = vunpack.c.l.b16 %v1750
        %v1815 = vunpack.c.l.b16 %v1751
        %v1816 = vunpack.c.l.b16 %v1752
        %v1817 = vunpack.c.l.b16 %v1753
        %v1818 = vunpack.c.l.b16 %v1754
        %v1819 = vunpack.c.l.b16 %v1755
        %v1820 = vunpack.c.l.b16 %v1756
        %v1821 = vunpack.c.l.b16 %v1757
        %v1822 = vunpack.c.l.b16 %v1758
        %v1823 = vunpack.c.l.b16 %v1759
        %v1824 = vunpack.c.l.b16 %v1760
        %v1825 = vpack.c.b16 %v1810, %v1809
        %v1826 = vpack.c.b16 %v1812, %v1811
        %v1827 = vpack.c.b16 %v1814, %v1813
        %v1828 = vpack.c.b16 %v1816, %v1815
        %v1829 = vpack.c.b16 %v1818, %v1817
        %v1830 = vpack.c.b16 %v1820, %v1819
        %v1831 = vpack.c.b16 %v1822, %v1821
        %v1832 = vpack.c.b16 %v1824, %v1823
        %1841 = vmatprep.subr.bf16.mxu0 0
        %1842 = vmatpush1.bf16.msra.mxu0 %v1825
        %1843 = vmatprep.subr.bf16.mxu0 0
        %1844 = vmatpush1.bf16.msra.mxu0 %v1826
        %1845 = vmatprep.subr.bf16.mxu0 0
        %1846 = vmatpush1.bf16.msra.mxu0 %v1827
        %1847 = vmatprep.subr.bf16.mxu0 0
        %1848 = vmatpush1.bf16.msra.mxu0 %v1828
        %1849 = vmatprep.subr.bf16.mxu0 0
        %1850 = vmatpush1.bf16.msra.mxu0 %v1829
        %1851 = vmatprep.subr.bf16.mxu0 0
        %1852 = vmatpush1.bf16.msra.mxu0 %v1830
        %1853 = vmatprep.subr.bf16.mxu0 0
        %1854 = vmatpush1.bf16.msra.mxu0 %v1831
        %1855 = vmatprep.subr.bf16.mxu0 0
        %1856 = vmatpush1.bf16.msra.mxu0 %v1832
        %1857 = vmatprep.subr.bf16.mxu0 0
        %1858 = vmatpush1.bf16.msra.mxu0 0
        %1859 = vmatprep.subr.bf16.mxu0 0
        %1860 = vmatpush1.bf16.msra.mxu0 0
        %1861 = vmatprep.subr.bf16.mxu0 0
        %1862 = vmatpush1.bf16.msra.mxu0 0
        %1863 = vmatprep.subr.bf16.mxu0 0
        %1864 = vmatpush1.bf16.msra.mxu0 0
        %1865 = vmatprep.subr.bf16.mxu0 0
        %1866 = vmatpush1.bf16.msra.mxu0 0
        %1867 = vmatprep.subr.bf16.mxu0 0
        %1868 = vmatpush1.bf16.msra.mxu0 0
        %1869 = vmatprep.subr.bf16.mxu0 0
        %1870 = vmatpush1.bf16.msra.mxu0 0
        %1871 = vmatprep.subr.bf16.mxu0 0
        %1872 = vmatpush1.bf16.msra.mxu0 0
        %1873 = vmatprep.mubr.bf16.mxu0 0
        %1874 = vmatmul.mubr.bf16.gmra.mrb[0].mxu0 %v1777
        %v1875 = vpop.f32.mrb[0].mxu0
        %v1876 = vadd.f32 0.0, %v1875
        %v1877 = vpop.f32.mrb[0].mxu0
        %v1878 = vpop.f32.mrb[0].mxu0
        %v1879 = vadd.f32 0.0, %v1878
        %v1880 = vpop.f32.mrb[0].mxu0
        %1881 = vmatprep.mubr.bf16.mxu0 0
        %1882 = vmatmul.mubr.bf16.gmra.mrb[0].mxu0 %v1778
        %v1883 = vpop.f32.mrb[0].mxu0
        %v1884 = vadd.f32 0.0, %v1883
        %v1885 = vpop.f32.mrb[0].mxu0
        %v1886 = vpop.f32.mrb[0].mxu0
        %v1887 = vadd.f32 0.0, %v1886
        %v1888 = vpop.f32.mrb[0].mxu0
        %1889 = vmatprep.mubr.bf16.mxu0 0
        %1890 = vmatmul.mubr.bf16.gmra.mrb[0].mxu0 %v1779
        %v1891 = vpop.f32.mrb[0].mxu0
        %v1892 = vadd.f32 0.0, %v1891
        %v1893 = vpop.f32.mrb[0].mxu0
        %v1894 = vpop.f32.mrb[0].mxu0
        %v1895 = vadd.f32 0.0, %v1894
        %v1896 = vpop.f32.mrb[0].mxu0
        %1897 = vmatprep.mubr.bf16.mxu0 0
        %1898 = vmatmul.mubr.bf16.gmra.mrb[0].mxu0 %v1780
        %v1899 = vpop.f32.mrb[0].mxu0
        %v1900 = vadd.f32 0.0, %v1899
        %v1901 = vpop.f32.mrb[0].mxu0
        %v1902 = vpop.f32.mrb[0].mxu0
        %v1903 = vadd.f32 0.0, %v1902
        %v1904 = vpop.f32.mrb[0].mxu0
        %1905 = vmatprep.mubr.bf16.mxu0 0
        %1906 = vmatmul.mubr.bf16.gmra.mrb[0].mxu0 %v1781
        %v1907 = vpop.f32.mrb[0].mxu0
        %v1908 = vadd.f32 0.0, %v1907
        %v1909 = vpop.f32.mrb[0].mxu0
        %v1910 = vpop.f32.mrb[0].mxu0
        %v1911 = vadd.f32 0.0, %v1910
        %v1912 = vpop.f32.mrb[0].mxu0
        %1913 = vmatprep.mubr.bf16.mxu0 0
        %1914 = vmatmul.mubr.bf16.gmra.mrb[0].mxu0 %v1782
        %v1915 = vpop.f32.mrb[0].mxu0
        %v1916 = vadd.f32 0.0, %v1915
        %v1917 = vpop.f32.mrb[0].mxu0
        %v1918 = vpop.f32.mrb[0].mxu0
        %v1919 = vadd.f32 0.0, %v1918
        %v1920 = vpop.f32.mrb[0].mxu0
        %1921 = vmatprep.mubr.bf16.mxu0 0
        %1922 = vmatmul.mubr.bf16.gmra.mrb[0].mxu0 %v1783
        %v1923 = vpop.f32.mrb[0].mxu0
        %v1924 = vadd.f32 0.0, %v1923
        %v1925 = vpop.f32.mrb[0].mxu0
        %v1926 = vpop.f32.mrb[0].mxu0
        %v1927 = vadd.f32 0.0, %v1926
        %v1928 = vpop.f32.mrb[0].mxu0
        %1929 = vmatprep.mubr.bf16.mxu0 0
        %1930 = vmatmul.mubr.bf16.gmra.mrb[0].mxu0 %v1784
        %v1931 = vpop.f32.mrb[0].mxu0
        %v1932 = vadd.f32 0.0, %v1931
        %v1933 = vpop.f32.mrb[0].mxu0
        %v1934 = vpop.f32.mrb[0].mxu0
        %v1935 = vadd.f32 0.0, %v1934
        %v1936 = vpop.f32.mrb[0].mxu0
        %1937 = vdwg.mxu0
        %v1938 = vadd.f32 %v1512, %v1876
        %v1939 = vadd.f32 %v1513, %v1879
        %v1940 = vadd.f32 %v1514, %v1884
        %v1941 = vadd.f32 %v1515, %v1887
        %v1942 = vadd.f32 %v1516, %v1892
        %v1943 = vadd.f32 %v1517, %v1895
        %v1944 = vadd.f32 %v1518, %v1900
        %v1945 = vadd.f32 %v1519, %v1903
        %v1946 = vadd.f32 %v1520, %v1908
        %v1947 = vadd.f32 %v1521, %v1911
        %v1948 = vadd.f32 %v1522, %v1916
        %v1949 = vadd.f32 %v1523, %v1919
        %v1950 = vadd.f32 %v1524, %v1924
        %v1951 = vadd.f32 %v1525, %v1927
        %v1952 = vadd.f32 %v1526, %v1932
        %v1953 = vadd.f32 %v1527, %v1935
        %s1954 = sadd.s32 %s151, 1
        %s1955 = smul.u32 %s1954, 3
        %s1956 = smul.addr %s1955, 4
        %s1957 = scalar_lea.vmem %s0, %s1956
        %v1958 = vld [vmem:[%s1957] sm:$0xf]
        %v1959 = vld [vmem:[%s1957 + $0x4] sm:$0xf]
        %v1960 = vld [vmem:[%s1957 + $0xc] sm:$0xf]
        %v1961 = vld [vmem:[%s1957 + $0x10] sm:$0xf]
        %v1962 = vld [vmem:[%s1957 + $0x18] sm:$0xf]
        %v1963 = vld [vmem:[%s1957 + $0x1c] sm:$0xf]
        %v1964 = vld [vmem:[%s1957 + $0x24] sm:$0xf]
        %v1965 = vld [vmem:[%s1957 + $0x28] sm:$0xf]
        %v1966 = vld [vmem:[%s1957 + $0x30] sm:$0xf]
        %v1967 = vld [vmem:[%s1957 + $0x34] sm:$0xf]
        %v1968 = vld [vmem:[%s1957 + $0x3c] sm:$0xf]
        %v1969 = vld [vmem:[%s1957 + $0x40] sm:$0xf]
        %v1970 = vld [vmem:[%s1957 + $0x48] sm:$0xf]
        %v1971 = vld [vmem:[%s1957 + $0x4c] sm:$0xf]
        %v1972 = vld [vmem:[%s1957 + $0x54] sm:$0xf]
        %v1973 = vld [vmem:[%s1957 + $0x58] sm:$0xf]
        %s1974 = scalar_lea.vmem %s1, 384
        %v1975 = vld [vmem:[%s1974] sm:$0xf]
        %v1976 = vld [vmem:[%s1974 + $0x4] sm:$0xf]
        %v1977 = vld [vmem:[%s1974 + $0x8] sm:$0xf]
        %v1978 = vld [vmem:[%s1974 + $0xc] sm:$0xf]
        %v1979 = vld [vmem:[%s1974 + $0x10] sm:$0xf]
        %v1980 = vld [vmem:[%s1974 + $0x14] sm:$0xf]
        %v1981 = vld [vmem:[%s1974 + $0x18] sm:$0xf]
        %v1982 = vld [vmem:[%s1974 + $0x1c] sm:$0xf]
        %v1983 = vld [vmem:[%s1974 + $0x20] sm:$0xf]
        %v1984 = vld [vmem:[%s1974 + $0x24] sm:$0xf]
        %v1985 = vld [vmem:[%s1974 + $0x28] sm:$0xf]
        %v1986 = vld [vmem:[%s1974 + $0x2c] sm:$0xf]
        %v1987 = vld [vmem:[%s1974 + $0x30] sm:$0xf]
        %v1988 = vld [vmem:[%s1974 + $0x34] sm:$0xf]
        %v1989 = vld [vmem:[%s1974 + $0x38] sm:$0xf]
        %v1990 = vld [vmem:[%s1974 + $0x3c] sm:$0xf]
        %v2007 = vunpack.c.l.b16 %v1958
        %v2008 = vunpack.c.l.b16 %v1959
        %v2009 = vunpack.c.l.b16 %v1960
        %v2010 = vunpack.c.l.b16 %v1961
        %v2011 = vunpack.c.l.b16 %v1962
        %v2012 = vunpack.c.l.b16 %v1963
        %v2013 = vunpack.c.l.b16 %v1964
        %v2014 = vunpack.c.l.b16 %v1965
        %v2015 = vunpack.c.l.b16 %v1966
        %v2016 = vunpack.c.l.b16 %v1967
        %v2017 = vunpack.c.l.b16 %v1968
        %v2018 = vunpack.c.l.b16 %v1969
        %v2019 = vunpack.c.l.b16 %v1970
        %v2020 = vunpack.c.l.b16 %v1971
        %v2021 = vunpack.c.l.b16 %v1972
        %v2022 = vunpack.c.l.b16 %v1973
        %v2023 = vpack.c.b16 %v2008, %v2007
        %v2024 = vpack.c.b16 %v2010, %v2009
        %v2025 = vpack.c.b16 %v2012, %v2011
        %v2026 = vpack.c.b16 %v2014, %v2013
        %v2027 = vpack.c.b16 %v2016, %v2015
        %v2028 = vpack.c.b16 %v2018, %v2017
        %v2029 = vpack.c.b16 %v2020, %v2019
        %v2030 = vpack.c.b16 %v2022, %v2021
        %v2055 = vunpack.c.l.b16 %v1975
        %v2056 = vunpack.c.l.b16 %v1976
        %v2057 = vunpack.c.l.b16 %v1977
        %v2058 = vunpack.c.l.b16 %v1978
        %v2059 = vunpack.c.l.b16 %v1979
        %v2060 = vunpack.c.l.b16 %v1980
        %v2061 = vunpack.c.l.b16 %v1981
        %v2062 = vunpack.c.l.b16 %v1982
        %v2063 = vunpack.c.l.b16 %v1983
        %v2064 = vunpack.c.l.b16 %v1984
        %v2065 = vunpack.c.l.b16 %v1985
        %v2066 = vunpack.c.l.b16 %v1986
        %v2067 = vunpack.c.l.b16 %v1987
        %v2068 = vunpack.c.l.b16 %v1988
        %v2069 = vunpack.c.l.b16 %v1989
        %v2070 = vunpack.c.l.b16 %v1990
        %v2071 = vpack.c.b16 %v2056, %v2055
        %v2072 = vpack.c.b16 %v2058, %v2057
        %v2073 = vpack.c.b16 %v2060, %v2059
        %v2074 = vpack.c.b16 %v2062, %v2061
        %v2075 = vpack.c.b16 %v2064, %v2063
        %v2076 = vpack.c.b16 %v2066, %v2065
        %v2077 = vpack.c.b16 %v2068, %v2067
        %v2078 = vpack.c.b16 %v2070, %v2069
        %2087 = vmatprep.subr.bf16.mxu0 0
        %2088 = vmatpush1.bf16.msra.mxu0 %v2071
        %2089 = vmatprep.subr.bf16.mxu0 0
        %2090 = vmatpush1.bf16.msra.mxu0 %v2072
        %2091 = vmatprep.subr.bf16.mxu0 0
        %2092 = vmatpush1.bf16.msra.mxu0 %v2073
        %2093 = vmatprep.subr.bf16.mxu0 0
        %2094 = vmatpush1.bf16.msra.mxu0 %v2074
        %2095 = vmatprep.subr.bf16.mxu0 0
        %2096 = vmatpush1.bf16.msra.mxu0 %v2075
        %2097 = vmatprep.subr.bf16.mxu0 0
        %2098 = vmatpush1.bf16.msra.mxu0 %v2076
        %2099 = vmatprep.subr.bf16.mxu0 0
        %2100 = vmatpush1.bf16.msra.mxu0 %v2077
        %2101 = vmatprep.subr.bf16.mxu0 0
        %2102 = vmatpush1.bf16.msra.mxu0 %v2078
        %2103 = vmatprep.subr.bf16.mxu0 0
        %2104 = vmatpush1.bf16.msra.mxu0 0
        %2105 = vmatprep.subr.bf16.mxu0 0
        %2106 = vmatpush1.bf16.msra.mxu0 0
        %2107 = vmatprep.subr.bf16.mxu0 0
        %2108 = vmatpush1.bf16.msra.mxu0 0
        %2109 = vmatprep.subr.bf16.mxu0 0
        %2110 = vmatpush1.bf16.msra.mxu0 0
        %2111 = vmatprep.subr.bf16.mxu0 0
        %2112 = vmatpush1.bf16.msra.mxu0 0
        %2113 = vmatprep.subr.bf16.mxu0 0
        %2114 = vmatpush1.bf16.msra.mxu0 0
        %2115 = vmatprep.subr.bf16.mxu0 0
        %2116 = vmatpush1.bf16.msra.mxu0 0
        %2117 = vmatprep.subr.bf16.mxu0 0
        %2118 = vmatpush1.bf16.msra.mxu0 0
        %2119 = vmatprep.mubr.bf16.mxu0 0
        %2120 = vmatmul.mubr.bf16.gmra.mrb[0].mxu0 %v2023
        %v2121 = vpop.f32.mrb[0].mxu0
        %v2122 = vadd.f32 0.0, %v2121
        %v2123 = vpop.f32.mrb[0].mxu0
        %v2124 = vpop.f32.mrb[0].mxu0
        %v2125 = vadd.f32 0.0, %v2124
        %v2126 = vpop.f32.mrb[0].mxu0
        %2127 = vmatprep.mubr.bf16.mxu0 0
        %2128 = vmatmul.mubr.bf16.gmra.mrb[0].mxu0 %v2024
        %v2129 = vpop.f32.mrb[0].mxu0
        %v2130 = vadd.f32 0.0, %v2129
        %v2131 = vpop.f32.mrb[0].mxu0
        %v2132 = vpop.f32.mrb[0].mxu0
        %v2133 = vadd.f32 0.0, %v2132
        %v2134 = vpop.f32.mrb[0].mxu0
        %2135 = vmatprep.mubr.bf16.mxu0 0
        %2136 = vmatmul.mubr.bf16.gmra.mrb[0].mxu0 %v2025
        %v2137 = vpop.f32.mrb[0].mxu0
        %v2138 = vadd.f32 0.0, %v2137
        %v2139 = vpop.f32.mrb[0].mxu0
        %v2140 = vpop.f32.mrb[0].mxu0
        %v2141 = vadd.f32 0.0, %v2140
        %v2142 = vpop.f32.mrb[0].mxu0
        %2143 = vmatprep.mubr.bf16.mxu0 0
        %2144 = vmatmul.mubr.bf16.gmra.mrb[0].mxu0 %v2026
        %v2145 = vpop.f32.mrb[0].mxu0
        %v2146 = vadd.f32 0.0, %v2145
        %v2147 = vpop.f32.mrb[0].mxu0
        %v2148 = vpop.f32.mrb[0].mxu0
        %v2149 = vadd.f32 0.0, %v2148
        %v2150 = vpop.f32.mrb[0].mxu0
        %2151 = vmatprep.mubr.bf16.mxu0 0
        %2152 = vmatmul.mubr.bf16.gmra.mrb[0].mxu0 %v2027
        %v2153 = vpop.f32.mrb[0].mxu0
        %v2154 = vadd.f32 0.0, %v2153
        %v2155 = vpop.f32.mrb[0].mxu0
        %v2156 = vpop.f32.mrb[0].mxu0
        %v2157 = vadd.f32 0.0, %v2156
        %v2158 = vpop.f32.mrb[0].mxu0
        %2159 = vmatprep.mubr.bf16.mxu0 0
        %2160 = vmatmul.mubr.bf16.gmra.mrb[0].mxu0 %v2028
        %v2161 = vpop.f32.mrb[0].mxu0
        %v2162 = vadd.f32 0.0, %v2161
        %v2163 = vpop.f32.mrb[0].mxu0
        %v2164 = vpop.f32.mrb[0].mxu0
        %v2165 = vadd.f32 0.0, %v2164
        %v2166 = vpop.f32.mrb[0].mxu0
        %2167 = vmatprep.mubr.bf16.mxu0 0
        %2168 = vmatmul.mubr.bf16.gmra.mrb[0].mxu0 %v2029
        %v2169 = vpop.f32.mrb[0].mxu0
        %v2170 = vadd.f32 0.0, %v2169
        %v2171 = vpop.f32.mrb[0].mxu0
        %v2172 = vpop.f32.mrb[0].mxu0
        %v2173 = vadd.f32 0.0, %v2172
        %v2174 = vpop.f32.mrb[0].mxu0
        %2175 = vmatprep.mubr.bf16.mxu0 0
        %2176 = vmatmul.mubr.bf16.gmra.mrb[0].mxu0 %v2030
        %v2177 = vpop.f32.mrb[0].mxu0
        %v2178 = vadd.f32 0.0, %v2177
        %v2179 = vpop.f32.mrb[0].mxu0
        %v2180 = vpop.f32.mrb[0].mxu0
        %v2181 = vadd.f32 0.0, %v2180
        %v2182 = vpop.f32.mrb[0].mxu0
        %2183 = vdwg.mxu0
        %v2184 = vadd.f32 %v1938, %v2122
        %v2185 = vadd.f32 %v1939, %v2125
        %v2186 = vadd.f32 %v1940, %v2130
        %v2187 = vadd.f32 %v1941, %v2133
        %v2188 = vadd.f32 %v1942, %v2138
        %v2189 = vadd.f32 %v1943, %v2141
        %v2190 = vadd.f32 %v1944, %v2146
        %v2191 = vadd.f32 %v1945, %v2149
        %v2192 = vadd.f32 %v1946, %v2154
        %v2193 = vadd.f32 %v1947, %v2157
        %v2194 = vadd.f32 %v1948, %v2162
        %v2195 = vadd.f32 %v1949, %v2165
        %v2196 = vadd.f32 %v1950, %v2170
        %v2197 = vadd.f32 %v1951, %v2173
        %v2198 = vadd.f32 %v1952, %v2178
        %v2199 = vadd.f32 %v1953, %v2181
        %s2200 = sadd.s32 %s1955, 51
        %s2201 = smul.addr %s2200, 4
        %s2202 = scalar_lea.vmem %s0, %s2201
        %v2203 = vld [vmem:[%s2202] sm:$0xf]
        %v2204 = vld [vmem:[%s2202 + $0x4] sm:$0xf]
        %v2205 = vld [vmem:[%s2202 + $0xc] sm:$0xf]
        %v2206 = vld [vmem:[%s2202 + $0x10] sm:$0xf]
        %v2207 = vld [vmem:[%s2202 + $0x18] sm:$0xf]
        %v2208 = vld [vmem:[%s2202 + $0x1c] sm:$0xf]
        %v2209 = vld [vmem:[%s2202 + $0x24] sm:$0xf]
        %v2210 = vld [vmem:[%s2202 + $0x28] sm:$0xf]
        %v2211 = vld [vmem:[%s2202 + $0x30] sm:$0xf]
        %v2212 = vld [vmem:[%s2202 + $0x34] sm:$0xf]
        %v2213 = vld [vmem:[%s2202 + $0x3c] sm:$0xf]
        %v2214 = vld [vmem:[%s2202 + $0x40] sm:$0xf]
        %v2215 = vld [vmem:[%s2202 + $0x48] sm:$0xf]
        %v2216 = vld [vmem:[%s2202 + $0x4c] sm:$0xf]
        %v2217 = vld [vmem:[%s2202 + $0x54] sm:$0xf]
        %v2218 = vld [vmem:[%s2202 + $0x58] sm:$0xf]
        %s2219 = scalar_lea.vmem %s1, 448
        %v2220 = vld [vmem:[%s2219] sm:$0xf]
        %v2221 = vld [vmem:[%s2219 + $0x4] sm:$0xf]
        %v2222 = vld [vmem:[%s2219 + $0x8] sm:$0xf]
        %v2223 = vld [vmem:[%s2219 + $0xc] sm:$0xf]
        %v2224 = vld [vmem:[%s2219 + $0x10] sm:$0xf]
        %v2225 = vld [vmem:[%s2219 + $0x14] sm:$0xf]
        %v2226 = vld [vmem:[%s2219 + $0x18] sm:$0xf]
        %v2227 = vld [vmem:[%s2219 + $0x1c] sm:$0xf]
        %v2228 = vld [vmem:[%s2219 + $0x20] sm:$0xf]
        %v2229 = vld [vmem:[%s2219 + $0x24] sm:$0xf]
        %v2230 = vld [vmem:[%s2219 + $0x28] sm:$0xf]
        %v2231 = vld [vmem:[%s2219 + $0x2c] sm:$0xf]
        %v2232 = vld [vmem:[%s2219 + $0x30] sm:$0xf]
        %v2233 = vld [vmem:[%s2219 + $0x34] sm:$0xf]
        %v2234 = vld [vmem:[%s2219 + $0x38] sm:$0xf]
        %v2235 = vld [vmem:[%s2219 + $0x3c] sm:$0xf]
        %v2252 = vunpack.c.l.b16 %v2203
        %v2253 = vunpack.c.l.b16 %v2204
        %v2254 = vunpack.c.l.b16 %v2205
        %v2255 = vunpack.c.l.b16 %v2206
        %v2256 = vunpack.c.l.b16 %v2207
        %v2257 = vunpack.c.l.b16 %v2208
        %v2258 = vunpack.c.l.b16 %v2209
        %v2259 = vunpack.c.l.b16 %v2210
        %v2260 = vunpack.c.l.b16 %v2211
        %v2261 = vunpack.c.l.b16 %v2212
        %v2262 = vunpack.c.l.b16 %v2213
        %v2263 = vunpack.c.l.b16 %v2214
        %v2264 = vunpack.c.l.b16 %v2215
        %v2265 = vunpack.c.l.b16 %v2216
        %v2266 = vunpack.c.l.b16 %v2217
        %v2267 = vunpack.c.l.b16 %v2218
        %v2268 = vpack.c.b16 %v2253, %v2252
        %v2269 = vpack.c.b16 %v2255, %v2254
        %v2270 = vpack.c.b16 %v2257, %v2256
        %v2271 = vpack.c.b16 %v2259, %v2258
        %v2272 = vpack.c.b16 %v2261, %v2260
        %v2273 = vpack.c.b16 %v2263, %v2262
        %v2274 = vpack.c.b16 %v2265, %v2264
        %v2275 = vpack.c.b16 %v2267, %v2266
        %v2300 = vunpack.c.l.b16 %v2220
        %v2301 = vunpack.c.l.b16 %v2221
        %v2302 = vunpack.c.l.b16 %v2222
        %v2303 = vunpack.c.l.b16 %v2223
        %v2304 = vunpack.c.l.b16 %v2224
        %v2305 = vunpack.c.l.b16 %v2225
        %v2306 = vunpack.c.l.b16 %v2226
        %v2307 = vunpack.c.l.b16 %v2227
        %v2308 = vunpack.c.l.b16 %v2228
        %v2309 = vunpack.c.l.b16 %v2229
        %v2310 = vunpack.c.l.b16 %v2230
        %v2311 = vunpack.c.l.b16 %v2231
        %v2312 = vunpack.c.l.b16 %v2232
        %v2313 = vunpack.c.l.b16 %v2233
        %v2314 = vunpack.c.l.b16 %v2234
        %v2315 = vunpack.c.l.b16 %v2235
        %v2316 = vpack.c.b16 %v2301, %v2300
        %v2317 = vpack.c.b16 %v2303, %v2302
        %v2318 = vpack.c.b16 %v2305, %v2304
        %v2319 = vpack.c.b16 %v2307, %v2306
        %v2320 = vpack.c.b16 %v2309, %v2308
        %v2321 = vpack.c.b16 %v2311, %v2310
        %v2322 = vpack.c.b16 %v2313, %v2312
        %v2323 = vpack.c.b16 %v2315, %v2314
        %2332 = vmatprep.subr.bf16.mxu0 0
        %2333 = vmatpush1.bf16.msra.mxu0 %v2316
        %2334 = vmatprep.subr.bf16.mxu0 0
        %2335 = vmatpush1.bf16.msra.mxu0 %v2317
        %2336 = vmatprep.subr.bf16.mxu0 0
        %2337 = vmatpush1.bf16.msra.mxu0 %v2318
        %2338 = vmatprep.subr.bf16.mxu0 0
        %2339 = vmatpush1.bf16.msra.mxu0 %v2319
        %2340 = vmatprep.subr.bf16.mxu0 0
        %2341 = vmatpush1.bf16.msra.mxu0 %v2320
        %2342 = vmatprep.subr.bf16.mxu0 0
        %2343 = vmatpush1.bf16.msra.mxu0 %v2321
        %2344 = vmatprep.subr.bf16.mxu0 0
        %2345 = vmatpush1.bf16.msra.mxu0 %v2322
        %2346 = vmatprep.subr.bf16.mxu0 0
        %2347 = vmatpush1.bf16.msra.mxu0 %v2323
        %2348 = vmatprep.subr.bf16.mxu0 0
        %2349 = vmatpush1.bf16.msra.mxu0 0
        %2350 = vmatprep.subr.bf16.mxu0 0
        %2351 = vmatpush1.bf16.msra.mxu0 0
        %2352 = vmatprep.subr.bf16.mxu0 0
        %2353 = vmatpush1.bf16.msra.mxu0 0
        %2354 = vmatprep.subr.bf16.mxu0 0
        %2355 = vmatpush1.bf16.msra.mxu0 0
        %2356 = vmatprep.subr.bf16.mxu0 0
        %2357 = vmatpush1.bf16.msra.mxu0 0
        %2358 = vmatprep.subr.bf16.mxu0 0
        %2359 = vmatpush1.bf16.msra.mxu0 0
        %2360 = vmatprep.subr.bf16.mxu0 0
        %2361 = vmatpush1.bf16.msra.mxu0 0
        %2362 = vmatprep.subr.bf16.mxu0 0
        %2363 = vmatpush1.bf16.msra.mxu0 0
        %2364 = vmatprep.mubr.bf16.mxu0 0
        %2365 = vmatmul.mubr.bf16.gmra.mrb[0].mxu0 %v2268
        %v2366 = vpop.f32.mrb[0].mxu0
        %v2367 = vadd.f32 0.0, %v2366
        %v2368 = vpop.f32.mrb[0].mxu0
        %v2369 = vpop.f32.mrb[0].mxu0
        %v2370 = vadd.f32 0.0, %v2369
        %v2371 = vpop.f32.mrb[0].mxu0
        %2372 = vmatprep.mubr.bf16.mxu0 0
        %2373 = vmatmul.mubr.bf16.gmra.mrb[0].mxu0 %v2269
        %v2374 = vpop.f32.mrb[0].mxu0
        %v2375 = vadd.f32 0.0, %v2374
        %v2376 = vpop.f32.mrb[0].mxu0
        %v2377 = vpop.f32.mrb[0].mxu0
        %v2378 = vadd.f32 0.0, %v2377
        %v2379 = vpop.f32.mrb[0].mxu0
        %2380 = vmatprep.mubr.bf16.mxu0 0
        %2381 = vmatmul.mubr.bf16.gmra.mrb[0].mxu0 %v2270
        %v2382 = vpop.f32.mrb[0].mxu0
        %v2383 = vadd.f32 0.0, %v2382
        %v2384 = vpop.f32.mrb[0].mxu0
        %v2385 = vpop.f32.mrb[0].mxu0
        %v2386 = vadd.f32 0.0, %v2385
        %v2387 = vpop.f32.mrb[0].mxu0
        %2388 = vmatprep.mubr.bf16.mxu0 0
        %2389 = vmatmul.mubr.bf16.gmra.mrb[0].mxu0 %v2271
        %v2390 = vpop.f32.mrb[0].mxu0
        %v2391 = vadd.f32 0.0, %v2390
        %v2392 = vpop.f32.mrb[0].mxu0
        %v2393 = vpop.f32.mrb[0].mxu0
        %v2394 = vadd.f32 0.0, %v2393
        %v2395 = vpop.f32.mrb[0].mxu0
        %2396 = vmatprep.mubr.bf16.mxu0 0
        %2397 = vmatmul.mubr.bf16.gmra.mrb[0].mxu0 %v2272
        %v2398 = vpop.f32.mrb[0].mxu0
        %v2399 = vadd.f32 0.0, %v2398
        %v2400 = vpop.f32.mrb[0].mxu0
        %v2401 = vpop.f32.mrb[0].mxu0
        %v2402 = vadd.f32 0.0, %v2401
        %v2403 = vpop.f32.mrb[0].mxu0
        %2404 = vmatprep.mubr.bf16.mxu0 0
        %2405 = vmatmul.mubr.bf16.gmra.mrb[0].mxu0 %v2273
        %v2406 = vpop.f32.mrb[0].mxu0
        %v2407 = vadd.f32 0.0, %v2406
        %v2408 = vpop.f32.mrb[0].mxu0
        %v2409 = vpop.f32.mrb[0].mxu0
        %v2410 = vadd.f32 0.0, %v2409
        %v2411 = vpop.f32.mrb[0].mxu0
        %2412 = vmatprep.mubr.bf16.mxu0 0
        %2413 = vmatmul.mubr.bf16.gmra.mrb[0].mxu0 %v2274
        %v2414 = vpop.f32.mrb[0].mxu0
        %v2415 = vadd.f32 0.0, %v2414
        %v2416 = vpop.f32.mrb[0].mxu0
        %v2417 = vpop.f32.mrb[0].mxu0
        %v2418 = vadd.f32 0.0, %v2417
        %v2419 = vpop.f32.mrb[0].mxu0
        %2420 = vmatprep.mubr.bf16.mxu0 0
        %2421 = vmatmul.mubr.bf16.gmra.mrb[0].mxu0 %v2275
        %v2422 = vpop.f32.mrb[0].mxu0
        %v2423 = vadd.f32 0.0, %v2422
        %v2424 = vpop.f32.mrb[0].mxu0
        %v2425 = vpop.f32.mrb[0].mxu0
        %v2426 = vadd.f32 0.0, %v2425
        %v2427 = vpop.f32.mrb[0].mxu0
        %2428 = vdwg.mxu0
        %v2429 = vadd.f32 %v2184, %v2367
        %v2430 = vadd.f32 %v2185, %v2370
        %v2431 = vadd.f32 %v2186, %v2375
        %v2432 = vadd.f32 %v2187, %v2378
        %v2433 = vadd.f32 %v2188, %v2383
        %v2434 = vadd.f32 %v2189, %v2386
        %v2435 = vadd.f32 %v2190, %v2391
        %v2436 = vadd.f32 %v2191, %v2394
        %v2437 = vadd.f32 %v2192, %v2399
        %v2438 = vadd.f32 %v2193, %v2402
        %v2439 = vadd.f32 %v2194, %v2407
        %v2440 = vadd.f32 %v2195, %v2410
        %v2441 = vadd.f32 %v2196, %v2415
        %v2442 = vadd.f32 %v2197, %v2418
        %v2443 = vadd.f32 %v2198, %v2423
        %v2444 = vadd.f32 %v2199, %v2426
        %v2445 = vld [vmem:[%s1957] sm:$0xf]
        %v2446 = vld [vmem:[%s1957 + $0x4] sm:$0xf]
        %v2447 = vld [vmem:[%s1957 + $0x8] sm:$0x1]
        %v2448 = vld [vmem:[%s1957 + $0xc] sm:$0xf]
        %v2449 = vld [vmem:[%s1957 + $0x10] sm:$0xf]
        %v2450 = vld [vmem:[%s1957 + $0x14] sm:$0x1]
        %v2451 = vld [vmem:[%s1957 + $0x18] sm:$0xf]
        %v2452 = vld [vmem:[%s1957 + $0x1c] sm:$0xf]
        %v2453 = vld [vmem:[%s1957 + $0x20] sm:$0x1]
        %v2454 = vld [vmem:[%s1957 + $0x24] sm:$0xf]
        %v2455 = vld [vmem:[%s1957 + $0x28] sm:$0xf]
        %v2456 = vld [vmem:[%s1957 + $0x2c] sm:$0x1]
        %v2457 = vld [vmem:[%s1957 + $0x30] sm:$0xf]
        %v2458 = vld [vmem:[%s1957 + $0x34] sm:$0xf]
        %v2459 = vld [vmem:[%s1957 + $0x38] sm:$0x1]
        %v2460 = vld [vmem:[%s1957 + $0x3c] sm:$0xf]
        %v2461 = vld [vmem:[%s1957 + $0x40] sm:$0xf]
        %v2462 = vld [vmem:[%s1957 + $0x44] sm:$0x1]
        %v2463 = vld [vmem:[%s1957 + $0x48] sm:$0xf]
        %v2464 = vld [vmem:[%s1957 + $0x4c] sm:$0xf]
        %v2465 = vld [vmem:[%s1957 + $0x50] sm:$0x1]
        %v2466 = vld [vmem:[%s1957 + $0x54] sm:$0xf]
        %v2467 = vld [vmem:[%s1957 + $0x58] sm:$0xf]
        %v2468 = vld [vmem:[%s1957 + $0x5c] sm:$0x1]
        %v2470 = vshrl.u32 %v2445, 16
        %v2472 = vrot.slane %v2470, 4
        %v2473 = vshll.u32 %v2445, 16
        %v2475 = vrot.slane %v2473, 5
        %v2476 = vor.u32 %v2472, %v2475
        %v2477 = vrot.slane %v2476, 4
        %v2479 = vshll.u32 %v2446, 16
        %v2481 = vrot.slane %v2479, 5
        %v2482 = vsel %vm635, %v2477, %v2481
        %v2483 = vshrl.u32 %v2446, 16
        %v2485 = vrot.slane %v2483, 4
        %v2486 = vor.u32 %v2485, %v2481
        %v2487 = vrot.slane %v2486, 4
        %v2489 = vshll.u32 %v2447, 16
        %v2491 = vrot.slane %v2489, 5
        %v2492 = vsel %vm635, %v2487, %v2491
        %v2494 = vshrl.u32 %v2448, 16
        %v2496 = vrot.slane %v2494, 4
        %v2497 = vshll.u32 %v2448, 16
        %v2499 = vrot.slane %v2497, 5
        %v2500 = vor.u32 %v2496, %v2499
        %v2501 = vrot.slane %v2500, 4
        %v2503 = vshll.u32 %v2449, 16
        %v2505 = vrot.slane %v2503, 5
        %v2506 = vsel %vm635, %v2501, %v2505
        %v2507 = vshrl.u32 %v2449, 16
        %v2509 = vrot.slane %v2507, 4
        %v2510 = vor.u32 %v2509, %v2505
        %v2511 = vrot.slane %v2510, 4
        %v2513 = vshll.u32 %v2450, 16
        %v2515 = vrot.slane %v2513, 5
        %v2516 = vsel %vm635, %v2511, %v2515
        %v2518 = vshrl.u32 %v2451, 16
        %v2520 = vrot.slane %v2518, 4
        %v2521 = vshll.u32 %v2451, 16
        %v2523 = vrot.slane %v2521, 5
        %v2524 = vor.u32 %v2520, %v2523
        %v2525 = vrot.slane %v2524, 4
        %v2527 = vshll.u32 %v2452, 16
        %v2529 = vrot.slane %v2527, 5
        %v2530 = vsel %vm635, %v2525, %v2529
        %v2531 = vshrl.u32 %v2452, 16
        %v2533 = vrot.slane %v2531, 4
        %v2534 = vor.u32 %v2533, %v2529
        %v2535 = vrot.slane %v2534, 4
        %v2537 = vshll.u32 %v2453, 16
        %v2539 = vrot.slane %v2537, 5
        %v2540 = vsel %vm635, %v2535, %v2539
        %v2542 = vshrl.u32 %v2454, 16
        %v2544 = vrot.slane %v2542, 4
        %v2545 = vshll.u32 %v2454, 16
        %v2547 = vrot.slane %v2545, 5
        %v2548 = vor.u32 %v2544, %v2547
        %v2549 = vrot.slane %v2548, 4
        %v2551 = vshll.u32 %v2455, 16
        %v2553 = vrot.slane %v2551, 5
        %v2554 = vsel %vm635, %v2549, %v2553
        %v2555 = vshrl.u32 %v2455, 16
        %v2557 = vrot.slane %v2555, 4
        %v2558 = vor.u32 %v2557, %v2553
        %v2559 = vrot.slane %v2558, 4
        %v2561 = vshll.u32 %v2456, 16
        %v2563 = vrot.slane %v2561, 5
        %v2564 = vsel %vm635, %v2559, %v2563
        %v2566 = vshrl.u32 %v2457, 16
        %v2568 = vrot.slane %v2566, 4
        %v2569 = vshll.u32 %v2457, 16
        %v2571 = vrot.slane %v2569, 5
        %v2572 = vor.u32 %v2568, %v2571
        %v2573 = vrot.slane %v2572, 4
        %v2575 = vshll.u32 %v2458, 16
        %v2577 = vrot.slane %v2575, 5
        %v2578 = vsel %vm635, %v2573, %v2577
        %v2579 = vshrl.u32 %v2458, 16
        %v2581 = vrot.slane %v2579, 4
        %v2582 = vor.u32 %v2581, %v2577
        %v2583 = vrot.slane %v2582, 4
        %v2585 = vshll.u32 %v2459, 16
        %v2587 = vrot.slane %v2585, 5
        %v2588 = vsel %vm635, %v2583, %v2587
        %v2590 = vshrl.u32 %v2460, 16
        %v2592 = vrot.slane %v2590, 4
        %v2593 = vshll.u32 %v2460, 16
        %v2595 = vrot.slane %v2593, 5
        %v2596 = vor.u32 %v2592, %v2595
        %v2597 = vrot.slane %v2596, 4
        %v2599 = vshll.u32 %v2461, 16
        %v2601 = vrot.slane %v2599, 5
        %v2602 = vsel %vm635, %v2597, %v2601
        %v2603 = vshrl.u32 %v2461, 16
        %v2605 = vrot.slane %v2603, 4
        %v2606 = vor.u32 %v2605, %v2601
        %v2607 = vrot.slane %v2606, 4
        %v2609 = vshll.u32 %v2462, 16
        %v2611 = vrot.slane %v2609, 5
        %v2612 = vsel %vm635, %v2607, %v2611
        %v2614 = vshrl.u32 %v2463, 16
        %v2616 = vrot.slane %v2614, 4
        %v2617 = vshll.u32 %v2463, 16
        %v2619 = vrot.slane %v2617, 5
        %v2620 = vor.u32 %v2616, %v2619
        %v2621 = vrot.slane %v2620, 4
        %v2623 = vshll.u32 %v2464, 16
        %v2625 = vrot.slane %v2623, 5
        %v2626 = vsel %vm635, %v2621, %v2625
        %v2627 = vshrl.u32 %v2464, 16
        %v2629 = vrot.slane %v2627, 4
        %v2630 = vor.u32 %v2629, %v2625
        %v2631 = vrot.slane %v2630, 4
        %v2633 = vshll.u32 %v2465, 16
        %v2635 = vrot.slane %v2633, 5
        %v2636 = vsel %vm635, %v2631, %v2635
        %v2638 = vshrl.u32 %v2466, 16
        %v2640 = vrot.slane %v2638, 4
        %v2641 = vshll.u32 %v2466, 16
        %v2643 = vrot.slane %v2641, 5
        %v2644 = vor.u32 %v2640, %v2643
        %v2645 = vrot.slane %v2644, 4
        %v2647 = vshll.u32 %v2467, 16
        %v2649 = vrot.slane %v2647, 5
        %v2650 = vsel %vm635, %v2645, %v2649
        %v2651 = vshrl.u32 %v2467, 16
        %v2653 = vrot.slane %v2651, 4
        %v2654 = vor.u32 %v2653, %v2649
        %v2655 = vrot.slane %v2654, 4
        %v2657 = vshll.u32 %v2468, 16
        %v2659 = vrot.slane %v2657, 5
        %v2660 = vsel %vm635, %v2655, %v2659
        %s2661 = scalar_lea.vmem %s1, 512
        %v2662 = vld [vmem:[%s2661] sm:$0xf]
        %v2663 = vld [vmem:[%s2661 + $0x4] sm:$0xf]
        %v2664 = vld [vmem:[%s2661 + $0x8] sm:$0xf]
        %v2665 = vld [vmem:[%s2661 + $0xc] sm:$0xf]
        %v2666 = vld [vmem:[%s2661 + $0x10] sm:$0xf]
        %v2667 = vld [vmem:[%s2661 + $0x14] sm:$0xf]
        %v2668 = vld [vmem:[%s2661 + $0x18] sm:$0xf]
        %v2669 = vld [vmem:[%s2661 + $0x1c] sm:$0xf]
        %v2670 = vld [vmem:[%s2661 + $0x20] sm:$0xf]
        %v2671 = vld [vmem:[%s2661 + $0x24] sm:$0xf]
        %v2672 = vld [vmem:[%s2661 + $0x28] sm:$0xf]
        %v2673 = vld [vmem:[%s2661 + $0x2c] sm:$0xf]
        %v2674 = vld [vmem:[%s2661 + $0x30] sm:$0xf]
        %v2675 = vld [vmem:[%s2661 + $0x34] sm:$0xf]
        %v2676 = vld [vmem:[%s2661 + $0x38] sm:$0xf]
        %v2677 = vld [vmem:[%s2661 + $0x3c] sm:$0xf]
        %v2678 = vunpack.c.l.b16 %v2482
        %v2679 = vunpack.c.l.b16 %v2492
        %v2680 = vunpack.c.l.b16 %v2506
        %v2681 = vunpack.c.l.b16 %v2516
        %v2682 = vunpack.c.l.b16 %v2530
        %v2683 = vunpack.c.l.b16 %v2540
        %v2684 = vunpack.c.l.b16 %v2554
        %v2685 = vunpack.c.l.b16 %v2564
        %v2686 = vunpack.c.l.b16 %v2578
        %v2687 = vunpack.c.l.b16 %v2588
        %v2688 = vunpack.c.l.b16 %v2602
        %v2689 = vunpack.c.l.b16 %v2612
        %v2690 = vunpack.c.l.b16 %v2626
        %v2691 = vunpack.c.l.b16 %v2636
        %v2692 = vunpack.c.l.b16 %v2650
        %v2693 = vunpack.c.l.b16 %v2660
        %v2694 = vpack.c.b16 %v2679, %v2678
        %v2695 = vpack.c.b16 %v2681, %v2680
        %v2696 = vpack.c.b16 %v2683, %v2682
        %v2697 = vpack.c.b16 %v2685, %v2684
        %v2698 = vpack.c.b16 %v2687, %v2686
        %v2699 = vpack.c.b16 %v2689, %v2688
        %v2700 = vpack.c.b16 %v2691, %v2690
        %v2701 = vpack.c.b16 %v2693, %v2692
        %v2726 = vunpack.c.l.b16 %v2662
        %v2727 = vunpack.c.l.b16 %v2663
        %v2728 = vunpack.c.l.b16 %v2664
        %v2729 = vunpack.c.l.b16 %v2665
        %v2730 = vunpack.c.l.b16 %v2666
        %v2731 = vunpack.c.l.b16 %v2667
        %v2732 = vunpack.c.l.b16 %v2668
        %v2733 = vunpack.c.l.b16 %v2669
        %v2734 = vunpack.c.l.b16 %v2670
        %v2735 = vunpack.c.l.b16 %v2671
        %v2736 = vunpack.c.l.b16 %v2672
        %v2737 = vunpack.c.l.b16 %v2673
        %v2738 = vunpack.c.l.b16 %v2674
        %v2739 = vunpack.c.l.b16 %v2675
        %v2740 = vunpack.c.l.b16 %v2676
        %v2741 = vunpack.c.l.b16 %v2677
        %v2742 = vpack.c.b16 %v2727, %v2726
        %v2743 = vpack.c.b16 %v2729, %v2728
        %v2744 = vpack.c.b16 %v2731, %v2730
        %v2745 = vpack.c.b16 %v2733, %v2732
        %v2746 = vpack.c.b16 %v2735, %v2734
        %v2747 = vpack.c.b16 %v2737, %v2736
        %v2748 = vpack.c.b16 %v2739, %v2738
        %v2749 = vpack.c.b16 %v2741, %v2740
        %2758 = vmatprep.subr.bf16.mxu0 0
        %2759 = vmatpush1.bf16.msra.mxu0 %v2742
        %2760 = vmatprep.subr.bf16.mxu0 0
        %2761 = vmatpush1.bf16.msra.mxu0 %v2743
        %2762 = vmatprep.subr.bf16.mxu0 0
        %2763 = vmatpush1.bf16.msra.mxu0 %v2744
        %2764 = vmatprep.subr.bf16.mxu0 0
        %2765 = vmatpush1.bf16.msra.mxu0 %v2745
        %2766 = vmatprep.subr.bf16.mxu0 0
        %2767 = vmatpush1.bf16.msra.mxu0 %v2746
        %2768 = vmatprep.subr.bf16.mxu0 0
        %2769 = vmatpush1.bf16.msra.mxu0 %v2747
        %2770 = vmatprep.subr.bf16.mxu0 0
        %2771 = vmatpush1.bf16.msra.mxu0 %v2748
        %2772 = vmatprep.subr.bf16.mxu0 0
        %2773 = vmatpush1.bf16.msra.mxu0 %v2749
        %2774 = vmatprep.subr.bf16.mxu0 0
        %2775 = vmatpush1.bf16.msra.mxu0 0
        %2776 = vmatprep.subr.bf16.mxu0 0
        %2777 = vmatpush1.bf16.msra.mxu0 0
        %2778 = vmatprep.subr.bf16.mxu0 0
        %2779 = vmatpush1.bf16.msra.mxu0 0
        %2780 = vmatprep.subr.bf16.mxu0 0
        %2781 = vmatpush1.bf16.msra.mxu0 0
        %2782 = vmatprep.subr.bf16.mxu0 0
        %2783 = vmatpush1.bf16.msra.mxu0 0
        %2784 = vmatprep.subr.bf16.mxu0 0
        %2785 = vmatpush1.bf16.msra.mxu0 0
        %2786 = vmatprep.subr.bf16.mxu0 0
        %2787 = vmatpush1.bf16.msra.mxu0 0
        %2788 = vmatprep.subr.bf16.mxu0 0
        %2789 = vmatpush1.bf16.msra.mxu0 0
        %2790 = vmatprep.mubr.bf16.mxu0 0
        %2791 = vmatmul.mubr.bf16.gmra.mrb[0].mxu0 %v2694
        %v2792 = vpop.f32.mrb[0].mxu0
        %v2793 = vadd.f32 0.0, %v2792
        %v2794 = vpop.f32.mrb[0].mxu0
        %v2795 = vpop.f32.mrb[0].mxu0
        %v2796 = vadd.f32 0.0, %v2795
        %v2797 = vpop.f32.mrb[0].mxu0
        %2798 = vmatprep.mubr.bf16.mxu0 0
        %2799 = vmatmul.mubr.bf16.gmra.mrb[0].mxu0 %v2695
        %v2800 = vpop.f32.mrb[0].mxu0
        %v2801 = vadd.f32 0.0, %v2800
        %v2802 = vpop.f32.mrb[0].mxu0
        %v2803 = vpop.f32.mrb[0].mxu0
        %v2804 = vadd.f32 0.0, %v2803
        %v2805 = vpop.f32.mrb[0].mxu0
        %2806 = vmatprep.mubr.bf16.mxu0 0
        %2807 = vmatmul.mubr.bf16.gmra.mrb[0].mxu0 %v2696
        %v2808 = vpop.f32.mrb[0].mxu0
        %v2809 = vadd.f32 0.0, %v2808
        %v2810 = vpop.f32.mrb[0].mxu0
        %v2811 = vpop.f32.mrb[0].mxu0
        %v2812 = vadd.f32 0.0, %v2811
        %v2813 = vpop.f32.mrb[0].mxu0
        %2814 = vmatprep.mubr.bf16.mxu0 0
        %2815 = vmatmul.mubr.bf16.gmra.mrb[0].mxu0 %v2697
        %v2816 = vpop.f32.mrb[0].mxu0
        %v2817 = vadd.f32 0.0, %v2816
        %v2818 = vpop.f32.mrb[0].mxu0
        %v2819 = vpop.f32.mrb[0].mxu0
        %v2820 = vadd.f32 0.0, %v2819
        %v2821 = vpop.f32.mrb[0].mxu0
        %2822 = vmatprep.mubr.bf16.mxu0 0
        %2823 = vmatmul.mubr.bf16.gmra.mrb[0].mxu0 %v2698
        %v2824 = vpop.f32.mrb[0].mxu0
        %v2825 = vadd.f32 0.0, %v2824
        %v2826 = vpop.f32.mrb[0].mxu0
        %v2827 = vpop.f32.mrb[0].mxu0
        %v2828 = vadd.f32 0.0, %v2827
        %v2829 = vpop.f32.mrb[0].mxu0
        %2830 = vmatprep.mubr.bf16.mxu0 0
        %2831 = vmatmul.mubr.bf16.gmra.mrb[0].mxu0 %v2699
        %v2832 = vpop.f32.mrb[0].mxu0
        %v2833 = vadd.f32 0.0, %v2832
        %v2834 = vpop.f32.mrb[0].mxu0
        %v2835 = vpop.f32.mrb[0].mxu0
        %v2836 = vadd.f32 0.0, %v2835
        %v2837 = vpop.f32.mrb[0].mxu0
        %2838 = vmatprep.mubr.bf16.mxu0 0
        %2839 = vmatmul.mubr.bf16.gmra.mrb[0].mxu0 %v2700
        %v2840 = vpop.f32.mrb[0].mxu0
        %v2841 = vadd.f32 0.0, %v2840
        %v2842 = vpop.f32.mrb[0].mxu0
        %v2843 = vpop.f32.mrb[0].mxu0
        %v2844 = vadd.f32 0.0, %v2843
        %v2845 = vpop.f32.mrb[0].mxu0
        %2846 = vmatprep.mubr.bf16.mxu0 0
        %2847 = vmatmul.mubr.bf16.gmra.mrb[0].mxu0 %v2701
        %v2848 = vpop.f32.mrb[0].mxu0
        %v2849 = vadd.f32 0.0, %v2848
        %v2850 = vpop.f32.mrb[0].mxu0
        %v2851 = vpop.f32.mrb[0].mxu0
        %v2852 = vadd.f32 0.0, %v2851
        %v2853 = vpop.f32.mrb[0].mxu0
        %2854 = vdwg.mxu0
        %v2855 = vadd.f32 %v2429, %v2793
        %v2856 = vadd.f32 %v2430, %v2796
        %v2857 = vadd.f32 %v2431, %v2801
        %v2858 = vadd.f32 %v2432, %v2804
        %v2859 = vadd.f32 %v2433, %v2809
        %v2860 = vadd.f32 %v2434, %v2812
        %v2861 = vadd.f32 %v2435, %v2817
        %v2862 = vadd.f32 %v2436, %v2820
        %v2863 = vadd.f32 %v2437, %v2825
        %v2864 = vadd.f32 %v2438, %v2828
        %v2865 = vadd.f32 %v2439, %v2833
        %v2866 = vadd.f32 %v2440, %v2836
        %v2867 = vadd.f32 %v2441, %v2841
        %v2868 = vadd.f32 %v2442, %v2844
        %v2869 = vadd.f32 %v2443, %v2849
        %v2870 = vadd.f32 %v2444, %v2852
        %v2871 = vld [vmem:[%s2] sm:$0x1]
        %v2873 = vlaneseq
        %v2874 = vshrl.u32 %v2873, 7
        %v2875 = vsub.s32 0, %v2874
        %v2876 = vrot.slane %v2871, %v2875
        %v2878 = vadd.f32 %v2855, %v2876
        %v2879 = vadd.f32 %v2856, %v2876
        %v2880 = vadd.f32 %v2857, %v2876
        %v2881 = vadd.f32 %v2858, %v2876
        %v2882 = vadd.f32 %v2859, %v2876
        %v2883 = vadd.f32 %v2860, %v2876
        %v2884 = vadd.f32 %v2861, %v2876
        %v2885 = vadd.f32 %v2862, %v2876
        %v2886 = vadd.f32 %v2863, %v2876
        %v2887 = vadd.f32 %v2864, %v2876
        %v2888 = vadd.f32 %v2865, %v2876
        %v2889 = vadd.f32 %v2866, %v2876
        %v2890 = vadd.f32 %v2867, %v2876
        %v2891 = vadd.f32 %v2868, %v2876
        %v2892 = vadd.f32 %v2869, %v2876
        %v2893 = vadd.f32 %v2870, %v2876
        %v2894 = vmax.f32 %v2878, 0.0
        %v2895 = vmax.f32 %v2879, 0.0
        %v2896 = vmax.f32 %v2880, 0.0
        %v2897 = vmax.f32 %v2881, 0.0
        %v2898 = vmax.f32 %v2882, 0.0
        %v2899 = vmax.f32 %v2883, 0.0
        %v2900 = vmax.f32 %v2884, 0.0
        %v2901 = vmax.f32 %v2885, 0.0
        %v2902 = vmax.f32 %v2886, 0.0
        %v2903 = vmax.f32 %v2887, 0.0
        %v2904 = vmax.f32 %v2888, 0.0
        %v2905 = vmax.f32 %v2889, 0.0
        %v2906 = vmax.f32 %v2890, 0.0
        %v2907 = vmax.f32 %v2891, 0.0
        %v2908 = vmax.f32 %v2892, 0.0
        %v2909 = vmax.f32 %v2893, 0.0
        %v2910 = vpack.c.bf16 %v2895, %v2894
        %v2911 = vpack.c.bf16 %v2897, %v2896
        %v2912 = vpack.c.bf16 %v2899, %v2898
        %v2913 = vpack.c.bf16 %v2901, %v2900
        %v2914 = vpack.c.bf16 %v2903, %v2902
        %v2915 = vpack.c.bf16 %v2905, %v2904
        %v2916 = vpack.c.bf16 %v2907, %v2906
        %v2917 = vpack.c.bf16 %v2909, %v2908
        %v2926 = vunpack.c.l.b16 %v2910
        %v2927 = vunpack.c.h.b16 %v2910
        %v2928 = vunpack.c.l.b16 %v2911
        %v2929 = vunpack.c.h.b16 %v2911
        %v2930 = vunpack.c.l.b16 %v2912
        %v2931 = vunpack.c.h.b16 %v2912
        %v2932 = vunpack.c.l.b16 %v2913
        %v2933 = vunpack.c.h.b16 %v2913
        %v2934 = vunpack.c.l.b16 %v2914
        %v2935 = vunpack.c.h.b16 %v2914
        %v2936 = vunpack.c.l.b16 %v2915
        %v2937 = vunpack.c.h.b16 %v2915
        %v2938 = vunpack.c.l.b16 %v2916
        %v2939 = vunpack.c.h.b16 %v2916
        %v2940 = vunpack.c.l.b16 %v2917
        %v2941 = vunpack.c.h.b16 %v2917
        %v2942 = vpack.c.b16 %v2926, %v2926
        %v2943 = vpack.c.b16 %v2927, %v2927
        %v2944 = vpack.c.b16 %v2928, %v2928
        %v2945 = vpack.c.b16 %v2929, %v2929
        %v2946 = vpack.c.b16 %v2930, %v2930
        %v2947 = vpack.c.b16 %v2931, %v2931
        %v2948 = vpack.c.b16 %v2932, %v2932
        %v2949 = vpack.c.b16 %v2933, %v2933
        %v2950 = vpack.c.b16 %v2934, %v2934
        %v2951 = vpack.c.b16 %v2935, %v2935
        %v2952 = vpack.c.b16 %v2936, %v2936
        %v2953 = vpack.c.b16 %v2937, %v2937
        %v2954 = vpack.c.b16 %v2938, %v2938
        %v2955 = vpack.c.b16 %v2939, %v2939
        %v2956 = vpack.c.b16 %v2940, %v2940
        %v2957 = vpack.c.b16 %v2941, %v2941
        %2974 = vst [vmem:[%s148] sm:$0xf] %v2942
        %2975 = vst [vmem:[%s148 + $0x4] sm:$0xf] %v2943
        %2976 = vst [vmem:[%s148 + $0x8] sm:$0xf] %v2944
        %2977 = vst [vmem:[%s148 + $0xc] sm:$0xf] %v2945
        %2978 = vst [vmem:[%s148 + $0x10] sm:$0xf] %v2946
        %2979 = vst [vmem:[%s148 + $0x14] sm:$0xf] %v2947
        %2980 = vst [vmem:[%s148 + $0x18] sm:$0xf] %v2948
        %2981 = vst [vmem:[%s148 + $0x1c] sm:$0xf] %v2949
        %2982 = vst [vmem:[%s148 + $0x20] sm:$0xf] %v2950
        %2983 = vst [vmem:[%s148 + $0x24] sm:$0xf] %v2951
        %2984 = vst [vmem:[%s148 + $0x28] sm:$0xf] %v2952
        %2985 = vst [vmem:[%s148 + $0x2c] sm:$0xf] %v2953
        %2986 = vst [vmem:[%s148 + $0x30] sm:$0xf] %v2954
        %2987 = vst [vmem:[%s148 + $0x34] sm:$0xf] %v2955
        %2988 = vst [vmem:[%s148 + $0x38] sm:$0xf] %v2956
        %2989 = vst [vmem:[%s148 + $0x3c] sm:$0xf] %v2957
        %s2990 = sand.u32 %s88, 1
        %s2991 = scalar_lea.sflag [#allocation3], %s2990
        %s2992 = sand.u32 %s88, 1
        %s2993 = smul.addr %s2992, 64
        %s2994 = scalar_lea.vmem [#allocation2], %s2993
        // Predicated region
        $region33: #{tpu_custom_call.1} parent=31 // pred_check
          %p2995 = pneg %p98
        $region34: #{tpu_custom_call.1} parent=31 // pred_check_branch
          %2997 = sbr.rel (%p2995) target = $region36
        $region35: #{tpu_custom_call.1} parent=31 // pred_region
          %s2998 = smul.u32 16, %s17
          %s3000 = ssub.s32 1024, 1024
          %3001 = vsyncadd %s2991, %s3000
          %s3002 = smul.addr %s2998, 64
          %s3003 = scalar_lea.hbm %s3, %s3002
          %s3004 = sshll.u32 %s2994, 4
          %s3005 = int_to_ptr.vmem [resolvable:$true] %s3004
          %3010 = dma.vmem_to_hbm [thread:$0]  %s3005, 1024, %s3003, %s2991, 64, 64, 4
        $region36: #{tpu_custom_call.1} parent=31 // pred_fallthru
          _
      $region32: #{tpu_custom_call.1} parent=5 // pred_fallthru
        _
      %p3011 = scmp.le.s32.totalorder 2, %s12
      // Predicated region
      $region37: #{tpu_custom_call.1} parent=5 // pred_check
        %p3012 = pneg %p3011
      $region38: #{tpu_custom_call.1} parent=5 // pred_check_branch
        %3014 = sbr.rel (%p3012) target = $region40
      $region39: #{tpu_custom_call.1} parent=5 // pred_region
        %s3015 = ssub.s32 %s12, 2
        // Predicated region
        $region41: #{tpu_custom_call.1} parent=39 // pred_check
          %p3016 = pneg %p104
        $region42: #{tpu_custom_call.1} parent=39 // pred_check_branch
          %3018 = sbr.rel (%p3016) target = $region44
        $region43: #{tpu_custom_call.1} parent=39 // pred_region
          %s3019 = sand.u32 %s89, 1
          %s3020 = scalar_lea.sflag [#allocation3], %s3019
          %s3021 = sand.u32 %s89, 1
          %s3022 = smul.addr %s3021, 64
          %s3023 = scalar_lea.vmem [#allocation2], %s3022
          %3024 = dma.done %s3020, 1024
        $region44: #{tpu_custom_call.1} parent=39 // pred_fallthru
          _
      $region40: #{tpu_custom_call.1} parent=5 // pred_fallthru
        _
    $region6: #{tpu_custom_call.1} parent=1 // loop_footer
      %s16 = sadd.s32 1, %s12
    $region7: #{tpu_custom_call.1} parent=1 // loop_footer_branch
      %11 = sbr.rel target = $region3
    $region8: #{tpu_custom_call.1} parent=1 // loop_exit
      _
    %3025 = vsyncpa [#allocation3], 1
    %s3026 = scalar_lea.sflag [#allocation3], 1
    %3027 = vsyncpa %s3026, 1

</llo_original>
